<compile_context>
chip_gen: v5e
topology: v5e:2x2
jax: 0.10.0
libtpu: 0.0.40
codegen_flags: <defaults>
</compile_context>

<pallas_src>
import numpy as np
import jax
import jax.numpy as jnp
from jax import lax
from jax.experimental import pallas as pl
from jax.experimental.pallas import tpu as pltpu

VMEM = pltpu.MemorySpace.VMEM
SMEM = pltpu.MemorySpace.SMEM


# ------------------------------ small helpers -------------------------------

def _round_up(v, m):
    return -(-v // m) * m


def _pad_axis_to(x, axis, size):
    if x.shape[axis] == size:
        return x
    pads = [(0, 0)] * x.ndim
    pads[axis] = (0, size - x.shape[axis])
    return jnp.pad(x, pads)


def _stable_sigmoid(x):
    e = jnp.exp(-jnp.abs(x))
    r = 1.0 / (1.0 + e)
    return jnp.where(x >= 0, r, 1.0 - r)


# ------------------------ conv + sigmoid + avg-pool --------------------------

def conv_pool_kernel(p_ref, w_ref, o_ref):
    # p_ref: (4, TM, Kp)  -- leading axis = 2x2 pool tap (di, dj)
    # w_ref: (Kp, 128)    -- conv weight, zero-padded lane-dense
    # o_ref: (TM, 128)    -- avg-pooled sigmoid(conv) output
    w = w_ref[...]
    s = _stable_sigmoid(jnp.dot(p_ref[0], w, preferred_element_type=jnp.float32))
    for t in range(1, 4):
        s = s + _stable_sigmoid(
            jnp.dot(p_ref[t], w, preferred_element_type=jnp.float32))
    o_ref[...] = 0.25 * s


def conv_sigmoid_pool(patches, wmat, block_m):
    _, rows, kp = patches.shape
    cout = wmat.shape[1]
    grid_m = rows // block_m
    return pl.pallas_call(
        conv_pool_kernel,
        out_shape=jax.ShapeDtypeStruct((rows, cout), jnp.float32),
        grid=(grid_m,),
        in_specs=[pl.BlockSpec((4, block_m, kp), lambda i: (0, i, 0)),
                  pl.BlockSpec((kp, cout), lambda i: (0, 0))],
        out_specs=pl.BlockSpec((block_m, cout), lambda i: (i, 0)),
        compiler_params=pltpu.CompilerParams(
            dimension_semantics=("parallel",),
            vmem_limit_bytes=32 * 1024 * 1024),
    )(patches, wmat)


# ----------------------------- head + NLL loss -------------------------------

def mlp_head_loss(feat, w1, b1, w2, b2, w3, b3, onehot, *, num_classes, batch):
    def head_kernel(feat_ref, w1_ref, b1_ref, w2_ref, b2_ref, w3_ref, b3_ref,
                    onehot_ref, loss_ref):
        h = jnp.dot(feat_ref[...], w1_ref[...],
                    preferred_element_type=jnp.float32) + b1_ref[...]
        h = jnp.dot(h, w2_ref[...], preferred_element_type=jnp.float32) + b2_ref[...]
        logits = jnp.dot(h, w3_ref[...], preferred_element_type=jnp.float32) + b3_ref[...]
        # mask lane-padding columns before log_softmax
        col = lax.broadcasted_iota(jnp.int32, logits.shape, 1)
        z = jnp.where(col < num_classes, logits, -1e30)
        m = jnp.max(z, axis=-1, keepdims=True)
        zz = z - m
        lse = jnp.log(jnp.sum(jnp.exp(zz), axis=-1, keepdims=True))
        logp = zz - lse
        # padded batch rows / padded classes have onehot == 0 -> contribute 0
        loss_ref[0] = -jnp.sum(onehot_ref[...] * logp) * (1.0 / batch)

    out = pl.pallas_call(
        head_kernel,
        out_shape=jax.ShapeDtypeStruct((1,), jnp.float32),
        in_specs=[pl.BlockSpec(memory_space=VMEM)] * 8,
        out_specs=pl.BlockSpec(memory_space=SMEM),
    )(feat, w1, b1, w2, b2, w3, b3, onehot)
    return out[0]


# ------------------------------ XLA-side glue --------------------------------

def _im2col_pool_taps(x_nhwc, k):
    """im2col patches grouped by 2x2 avg-pool tap.

    Returns (taps, (hp, wp), valid_rows); taps has shape
    (4, round_up(N*hp*wp, 8), C*k*k).  taps[di*2+dj] holds, for pooled position
    (n, i, j), the patch of conv output position (2i+di, 2j+dj); the patch
    features are ordered (Cin, kh, kw) to match PyTorch's weight.reshape(Cout,-1).
    """
    n, h, w, c = x_nhwc.shape
    ho, wo = h - k + 1, w - k + 1
    hp, wp = ho // 2, wo // 2
    cols = [x_nhwc[:, i:i + ho, j:j + wo, :] for i in range(k) for j in range(k)]
    p = jnp.stack(cols, axis=3)                       # (N, Ho, Wo, k*k, C)
    p = jnp.transpose(p, (0, 1, 2, 4, 3))             # (N, Ho, Wo, C, k*k)
    p = p.reshape(n, ho, wo, c * k * k)
    taps = [p[:, di:di + 2 * hp:2, dj:dj + 2 * wp:2, :]
            for di in (0, 1) for dj in (0, 1)]        # 4 x (N, hp, wp, C*k*k)
    taps = jnp.stack(taps, axis=0).reshape(4, n * hp * wp, c * k * k)
    rows = n * hp * wp
    taps = _pad_axis_to(taps, 1, _round_up(rows, 8))
    return taps, (hp, wp), rows


def _pick_block_m(rows, target=256):
    # largest multiple-of-8 divisor of rows that is <= target
    for cand in range(min(rows, target), 0, -8):
        if rows % cand == 0:
            return cand
    return rows


def _conv_block(x_nhwc, conv_w, k):
    cout = conv_w.shape[0]
    taps, (hp, wp), rows = _im2col_pool_taps(x_nhwc, k)
    kp = _round_up(taps.shape[-1], 128)
    taps = _pad_axis_to(taps, 2, kp)
    wmat = conv_w.reshape(cout, -1).T                 # (Cin*k*k, Cout)
    wmat = _pad_axis_to(_pad_axis_to(wmat, 0, kp), 1, _round_up(cout, 128))
    block_m = _pick_block_m(taps.shape[1])
    pooled = conv_sigmoid_pool(taps, wmat, block_m)   # (rows_pad, 128)
    n = x_nhwc.shape[0]
    return pooled[:rows, :cout].reshape(n, hp, wp, cout)


def lenet_loss_pallas(x_nchw, y_true, params):
    cw1, cw2, lw1, lb1, lw2, lb2, lw3, lb3 = params
    n = x_nchw.shape[0]
    num_classes = lw3.shape[0]

    x = jnp.transpose(x_nchw, (0, 2, 3, 1))            # NCHW -> NHWC
    x = jnp.pad(x, ((0, 0), (2, 2), (2, 2), (0, 0)))   # conv1 padding=2

    o1 = _conv_block(x, cw1, 5)     # (N, 14, 14, 6)
    o2 = _conv_block(o1, cw2, 5)    # (N, 5, 5, 16)

    # flatten in PyTorch's NCHW order: (N, C, H, W) -> (N, C*H*W)
    feat = jnp.transpose(o2, (0, 3, 1, 2)).reshape(n, -1)   # (N, 400)

    npad = _round_up(n, 8)
    kf = _round_up(feat.shape[1], 128)                 # 512
    featp = _pad_axis_to(_pad_axis_to(feat, 1, kf), 0, npad)

    def pad_w(w, kin, kout):
        return _pad_axis_to(_pad_axis_to(w, 0, kin), 1, kout)

    w1 = pad_w(lw1.T, kf, 128)
    w2 = pad_w(lw2.T, 128, 128)
    w3 = pad_w(lw3.T, 128, 128)
    b1 = _pad_axis_to(lb1.reshape(1, -1), 1, 128)
    b2 = _pad_axis_to(lb2.reshape(1, -1), 1, 128)
    b3 = _pad_axis_to(lb3.reshape(1, -1), 1, 128)
    onehot = jax.nn.one_hot(y_true, num_classes, dtype=jnp.float32)
    onehot = _pad_axis_to(_pad_axis_to(onehot, 1, 128), 0, npad)

    return mlp_head_loss(featp, w1, b1, w2, b2, w3, b3, onehot,
                         num_classes=num_classes, batch=n)


# ---------------------------- pure-JAX reference -----------------------------

def _avg_pool_nchw(x):
    nn, c, h, w = x.shape
    return x.reshape(nn, c, h // 2, 2, w // 2, 2).mean(axis=(3, 5))


def lenet_loss_ref(x, y_true, params):
    cw1, cw2, lw1, lb1, lw2, lb2, lw3, lb3 = params
    dn = ('NCHW', 'OIHW', 'NCHW')
    out = lax.conv_general_dilated(x, cw1, (1, 1), ((2, 2), (2, 2)),
                                   dimension_numbers=dn)
    out = jax.nn.sigmoid(out)
    out = _avg_pool_nchw(out)
    out = lax.conv_general_dilated(out, cw2, (1, 1), 'VALID',
                                   dimension_numbers=dn)
    out = jax.nn.sigmoid(out)
    out = _avg_pool_nchw(out)
    out = out.reshape(out.shape[0], -1)
    out = out @ lw1.T + lb1
    out = out @ lw2.T + lb2
    out = out @ lw3.T + lb3
    logp = jax.nn.log_softmax(out, axis=-1)
    return -jnp.mean(logp[jnp.arange(out.shape[0]), y_true])


# --------------------------------- main ---------------------------------------

if __name__ == "__main__":
    key = jax.random.PRNGKey(0)
    ks = jax.random.split(key, 10)
    N, input_shape, num_classes = 2, 28, 10
    feat_dim = ((input_shape // 2 - 4) // 2) ** 2 * 16        # 400

    # deterministic synthetic parameters (shapes from TorchLeNet.__init__)
    cw1 = 0.1 * jax.random.normal(ks[0], (6, 3, 5, 5), jnp.float32)
    cw2 = 0.1 * jax.random.normal(ks[1], (16, 6, 5, 5), jnp.float32)
    lw1 = 0.1 * jax.random.normal(ks[2], (120, feat_dim), jnp.float32)
    lb1 = 0.1 * jax.random.normal(ks[3], (120,), jnp.float32)
    lw2 = 0.1 * jax.random.normal(ks[4], (84, 120), jnp.float32)
    lb2 = 0.1 * jax.random.normal(ks[5], (84,), jnp.float32)
    lw3 = 0.1 * jax.random.normal(ks[6], (num_classes, 84), jnp.float32)
    lb3 = 0.1 * jax.random.normal(ks[7], (num_classes,), jnp.float32)
    params = (cw1, cw2, lw1, lb1, lw2, lb2, lw3, lb3)

    x = jax.random.normal(ks[8], (N, 3, input_shape, input_shape), jnp.float32)
    y_true = jax.random.randint(ks[9], (N,), 0, num_classes)

    loss = jax.jit(lenet_loss_pallas)(x, y_true, params)
    loss = jax.block_until_ready(loss)

    ref = lenet_loss_ref(x, y_true, params)
    assert np.allclose(np.asarray(loss), np.asarray(ref), atol=1e-4, rtol=1e-4), (loss, ref)
    print("KERNEL_OK")
</pallas_src>

<mosaic_0001>
module attributes {stable_mosaic.version = 11 : i64} {
  func.func @conv_pool_kernel(%arg0: i32, %arg1: memref<4x56x128xf32, #tpu.memory_space<vmem>>, %arg2: memref<128x128xf32, #tpu.memory_space<vmem>>, %arg3: memref<56x128xf32, #tpu.memory_space<vmem>>) attributes {dimension_semantics = [#tpu.dimension_semantics<parallel>], iteration_bounds = array<i64: 7>, scalar_prefetch = 0 : i64, scratch_operands = 0 : i64, tpu.core_type = #tpu.core_type<tc>, window_params = [{transform_indices = @transform_0, window_bounds = array<i64: 4, 56, 128>}, {pipeline_mode = #tpu.pipeline_mode<synchronous>, transform_indices = @transform_1, window_bounds = array<i64: 128, 128>}, {transform_indices = @transform_2, window_bounds = array<i64: 56, 128>}]} {
    %c0 = arith.constant 0 : index
    %c0_0 = arith.constant 0 : index
    %0 = vector.load %arg2[%c0, %c0_0] : memref<128x128xf32, #tpu.memory_space<vmem>>, vector<128x128xf32>
    %c0_1 = arith.constant 0 : index
    %c0_2 = arith.constant 0 : index
    %c0_3 = arith.constant 0 : index
    %1 = vector.load %arg1[%c0_1, %c0_2, %c0_3] : memref<4x56x128xf32, #tpu.memory_space<vmem>>, vector<1x56x128xf32>
    %2 = vector.shape_cast %1 : vector<1x56x128xf32> to vector<56x128xf32>
    %cst = arith.constant dense<0.000000e+00> : vector<56x128xf32>
    %3 = tpu.matmul %2, %0, %cst {dimension_numbers = #tpu.dot_dimension_numbers<[1], [0], [0], [1], [0, 0, 1, 1], [], []>} : vector<56x128xf32>, vector<128x128xf32>, vector<56x128xf32> -> vector<56x128xf32>
    %4 = math.absf %3 : vector<56x128xf32>
    %cst_4 = arith.constant 0.000000e+00 : f32
    %5 = vector.broadcast %cst_4 : f32 to vector<56x128xf32>
    %6 = arith.subf %5, %4 : vector<56x128xf32>
    %7 = math.exp %6 : vector<56x128xf32>
    %cst_5 = arith.constant 1.000000e+00 : f32
    %8 = vector.broadcast %cst_5 : f32 to vector<56x128xf32>
    %9 = arith.addf %8, %7 : vector<56x128xf32>
    %cst_6 = arith.constant 1.000000e+00 : f32
    %10 = vector.broadcast %cst_6 : f32 to vector<56x128xf32>
    %11 = arith.divf %10, %9 : vector<56x128xf32>
    %cst_7 = arith.constant 0.000000e+00 : f32
    %12 = vector.broadcast %cst_7 : f32 to vector<56x128xf32>
    %13 = arith.cmpf oge, %3, %12 : vector<56x128xf32>
    %cst_8 = arith.constant 1.000000e+00 : f32
    %14 = vector.broadcast %cst_8 : f32 to vector<56x128xf32>
    %15 = arith.subf %14, %11 : vector<56x128xf32>
    %16 = arith.select %13, %11, %15 : vector<56x128xi1>, vector<56x128xf32>
    %c1 = arith.constant 1 : index
    %c0_9 = arith.constant 0 : index
    %c0_10 = arith.constant 0 : index
    %17 = vector.load %arg1[%c1, %c0_9, %c0_10] : memref<4x56x128xf32, #tpu.memory_space<vmem>>, vector<1x56x128xf32>
    %18 = vector.shape_cast %17 : vector<1x56x128xf32> to vector<56x128xf32>
    %cst_11 = arith.constant dense<0.000000e+00> : vector<56x128xf32>
    %19 = tpu.matmul %18, %0, %cst_11 {dimension_numbers = #tpu.dot_dimension_numbers<[1], [0], [0], [1], [0, 0, 1, 1], [], []>} : vector<56x128xf32>, vector<128x128xf32>, vector<56x128xf32> -> vector<56x128xf32>
    %20 = math.absf %19 : vector<56x128xf32>
    %cst_12 = arith.constant 0.000000e+00 : f32
    %21 = vector.broadcast %cst_12 : f32 to vector<56x128xf32>
    %22 = arith.subf %21, %20 : vector<56x128xf32>
    %23 = math.exp %22 : vector<56x128xf32>
    %cst_13 = arith.constant 1.000000e+00 : f32
    %24 = vector.broadcast %cst_13 : f32 to vector<56x128xf32>
    %25 = arith.addf %24, %23 : vector<56x128xf32>
    %cst_14 = arith.constant 1.000000e+00 : f32
    %26 = vector.broadcast %cst_14 : f32 to vector<56x128xf32>
    %27 = arith.divf %26, %25 : vector<56x128xf32>
    %cst_15 = arith.constant 0.000000e+00 : f32
    %28 = vector.broadcast %cst_15 : f32 to vector<56x128xf32>
    %29 = arith.cmpf oge, %19, %28 : vector<56x128xf32>
    %cst_16 = arith.constant 1.000000e+00 : f32
    %30 = vector.broadcast %cst_16 : f32 to vector<56x128xf32>
    %31 = arith.subf %30, %27 : vector<56x128xf32>
    %32 = arith.select %29, %27, %31 : vector<56x128xi1>, vector<56x128xf32>
    %33 = arith.addf %16, %32 : vector<56x128xf32>
    %c2 = arith.constant 2 : index
    %c0_17 = arith.constant 0 : index
    %c0_18 = arith.constant 0 : index
    %34 = vector.load %arg1[%c2, %c0_17, %c0_18] : memref<4x56x128xf32, #tpu.memory_space<vmem>>, vector<1x56x128xf32>
    %35 = vector.shape_cast %34 : vector<1x56x128xf32> to vector<56x128xf32>
    %cst_19 = arith.constant dense<0.000000e+00> : vector<56x128xf32>
    %36 = tpu.matmul %35, %0, %cst_19 {dimension_numbers = #tpu.dot_dimension_numbers<[1], [0], [0], [1], [0, 0, 1, 1], [], []>} : vector<56x128xf32>, vector<128x128xf32>, vector<56x128xf32> -> vector<56x128xf32>
    %37 = math.absf %36 : vector<56x128xf32>
    %cst_20 = arith.constant 0.000000e+00 : f32
    %38 = vector.broadcast %cst_20 : f32 to vector<56x128xf32>
    %39 = arith.subf %38, %37 : vector<56x128xf32>
    %40 = math.exp %39 : vector<56x128xf32>
    %cst_21 = arith.constant 1.000000e+00 : f32
    %41 = vector.broadcast %cst_21 : f32 to vector<56x128xf32>
    %42 = arith.addf %41, %40 : vector<56x128xf32>
    %cst_22 = arith.constant 1.000000e+00 : f32
    %43 = vector.broadcast %cst_22 : f32 to vector<56x128xf32>
    %44 = arith.divf %43, %42 : vector<56x128xf32>
    %cst_23 = arith.constant 0.000000e+00 : f32
    %45 = vector.broadcast %cst_23 : f32 to vector<56x128xf32>
    %46 = arith.cmpf oge, %36, %45 : vector<56x128xf32>
    %cst_24 = arith.constant 1.000000e+00 : f32
    %47 = vector.broadcast %cst_24 : f32 to vector<56x128xf32>
    %48 = arith.subf %47, %44 : vector<56x128xf32>
    %49 = arith.select %46, %44, %48 : vector<56x128xi1>, vector<56x128xf32>
    %50 = arith.addf %33, %49 : vector<56x128xf32>
    %c3 = arith.constant 3 : index
    %c0_25 = arith.constant 0 : index
    %c0_26 = arith.constant 0 : index
    %51 = vector.load %arg1[%c3, %c0_25, %c0_26] : memref<4x56x128xf32, #tpu.memory_space<vmem>>, vector<1x56x128xf32>
    %52 = vector.shape_cast %51 : vector<1x56x128xf32> to vector<56x128xf32>
    %cst_27 = arith.constant dense<0.000000e+00> : vector<56x128xf32>
    %53 = tpu.matmul %52, %0, %cst_27 {dimension_numbers = #tpu.dot_dimension_numbers<[1], [0], [0], [1], [0, 0, 1, 1], [], []>} : vector<56x128xf32>, vector<128x128xf32>, vector<56x128xf32> -> vector<56x128xf32>
    %54 = math.absf %53 : vector<56x128xf32>
    %cst_28 = arith.constant 0.000000e+00 : f32
    %55 = vector.broadcast %cst_28 : f32 to vector<56x128xf32>
    %56 = arith.subf %55, %54 : vector<56x128xf32>
    %57 = math.exp %56 : vector<56x128xf32>
    %cst_29 = arith.constant 1.000000e+00 : f32
    %58 = vector.broadcast %cst_29 : f32 to vector<56x128xf32>
    %59 = arith.addf %58, %57 : vector<56x128xf32>
    %cst_30 = arith.constant 1.000000e+00 : f32
    %60 = vector.broadcast %cst_30 : f32 to vector<56x128xf32>
    %61 = arith.divf %60, %59 : vector<56x128xf32>
    %cst_31 = arith.constant 0.000000e+00 : f32
    %62 = vector.broadcast %cst_31 : f32 to vector<56x128xf32>
    %63 = arith.cmpf oge, %53, %62 : vector<56x128xf32>
    %cst_32 = arith.constant 1.000000e+00 : f32
    %64 = vector.broadcast %cst_32 : f32 to vector<56x128xf32>
    %65 = arith.subf %64, %61 : vector<56x128xf32>
    %66 = arith.select %63, %61, %65 : vector<56x128xi1>, vector<56x128xf32>
    %67 = arith.addf %50, %66 : vector<56x128xf32>
    %cst_33 = arith.constant 2.500000e-01 : f32
    %68 = vector.broadcast %cst_33 : f32 to vector<56x128xf32>
    %69 = arith.mulf %68, %67 : vector<56x128xf32>
    %c0_34 = arith.constant 0 : index
    %c0_35 = arith.constant 0 : index
    %70 = vector.load %arg3[%c0_34, %c0_35] : memref<56x128xf32, #tpu.memory_space<vmem>>, vector<56x128xf32>
    tpu.vector_store %arg3[%c0_34, %c0_35], %69 {strides = array<i32>} : memref<56x128xf32, #tpu.memory_space<vmem>>, vector<56x128xf32>,
    return
  }
  func.func @transform_0(%arg0: i32) -> (i32, i32, i32) {
    %c0_i32 = arith.constant 0 : i32
    %c0_i32_0 = arith.constant 0 : i32
    %c0_i32_1 = arith.constant 0 : i32
    return %c0_i32, %arg0, %c0_i32_0 : i32, i32, i32
  }
  func.func @transform_1(%arg0: i32) -> (i32, i32) {
    %c0_i32 = arith.constant 0 : i32
    %c0_i32_0 = arith.constant 0 : i32
    %c0_i32_1 = arith.constant 0 : i32
    return %c0_i32, %c0_i32_0 : i32, i32
  }
  func.func @transform_2(%arg0: i32) -> (i32, i32) {
    %c0_i32 = arith.constant 0 : i32
    %c0_i32_0 = arith.constant 0 : i32
    return %arg0, %c0_i32 : i32, i32
  }
}

module attributes {stable_mosaic.version = 11 : i64} {
  func.func @conv_pool_kernel(%arg0: i32, %arg1: memref<4x56x256xf32, #tpu.memory_space<vmem>>, %arg2: memref<256x128xf32, #tpu.memory_space<vmem>>, %arg3: memref<56x128xf32, #tpu.memory_space<vmem>>) attributes {dimension_semantics = [#tpu.dimension_semantics<parallel>], iteration_bounds = array<i64: 1>, scalar_prefetch = 0 : i64, scratch_operands = 0 : i64, tpu.core_type = #tpu.core_type<tc>, window_params = [{transform_indices = @transform_0, window_bounds = array<i64: 4, 56, 256>}, {pipeline_mode = #tpu.pipeline_mode<synchronous>, transform_indices = @transform_1, window_bounds = array<i64: 256, 128>}, {transform_indices = @transform_2, window_bounds = array<i64: 56, 128>}]} {
    %c0 = arith.constant 0 : index
    %c0_0 = arith.constant 0 : index
    %0 = vector.load %arg2[%c0, %c0_0] : memref<256x128xf32, #tpu.memory_space<vmem>>, vector<256x128xf32>
    %c0_1 = arith.constant 0 : index
    %c0_2 = arith.constant 0 : index
    %c0_3 = arith.constant 0 : index
    %1 = vector.load %arg1[%c0_1, %c0_2, %c0_3] : memref<4x56x256xf32, #tpu.memory_space<vmem>>, vector<1x56x256xf32>
    %2 = vector.shape_cast %1 : vector<1x56x256xf32> to vector<56x256xf32>
    %cst = arith.constant dense<0.000000e+00> : vector<56x128xf32>
    %3 = tpu.matmul %2, %0, %cst {dimension_numbers = #tpu.dot_dimension_numbers<[1], [0], [0], [1], [0, 0, 1, 1], [], []>} : vector<56x256xf32>, vector<256x128xf32>, vector<56x128xf32> -> vector<56x128xf32>
    %4 = math.absf %3 : vector<56x128xf32>
    %cst_4 = arith.constant 0.000000e+00 : f32
    %5 = vector.broadcast %cst_4 : f32 to vector<56x128xf32>
    %6 = arith.subf %5, %4 : vector<56x128xf32>
    %7 = math.exp %6 : vector<56x128xf32>
    %cst_5 = arith.constant 1.000000e+00 : f32
    %8 = vector.broadcast %cst_5 : f32 to vector<56x128xf32>
    %9 = arith.addf %8, %7 : vector<56x128xf32>
    %cst_6 = arith.constant 1.000000e+00 : f32
    %10 = vector.broadcast %cst_6 : f32 to vector<56x128xf32>
    %11 = arith.divf %10, %9 : vector<56x128xf32>
    %cst_7 = arith.constant 0.000000e+00 : f32
    %12 = vector.broadcast %cst_7 : f32 to vector<56x128xf32>
    %13 = arith.cmpf oge, %3, %12 : vector<56x128xf32>
    %cst_8 = arith.constant 1.000000e+00 : f32
    %14 = vector.broadcast %cst_8 : f32 to vector<56x128xf32>
    %15 = arith.subf %14, %11 : vector<56x128xf32>
    %16 = arith.select %13, %11, %15 : vector<56x128xi1>, vector<56x128xf32>
    %c1 = arith.constant 1 : index
    %c0_9 = arith.constant 0 : index
    %c0_10 = arith.constant 0 : index
    %17 = vector.load %arg1[%c1, %c0_9, %c0_10] : memref<4x56x256xf32, #tpu.memory_space<vmem>>, vector<1x56x256xf32>
    %18 = vector.shape_cast %17 : vector<1x56x256xf32> to vector<56x256xf32>
    %cst_11 = arith.constant dense<0.000000e+00> : vector<56x128xf32>
    %19 = tpu.matmul %18, %0, %cst_11 {dimension_numbers = #tpu.dot_dimension_numbers<[1], [0], [0], [1], [0, 0, 1, 1], [], []>} : vector<56x256xf32>, vector<256x128xf32>, vector<56x128xf32> -> vector<56x128xf32>
    %20 = math.absf %19 : vector<56x128xf32>
    %cst_12 = arith.constant 0.000000e+00 : f32
    %21 = vector.broadcast %cst_12 : f32 to vector<56x128xf32>
    %22 = arith.subf %21, %20 : vector<56x128xf32>
    %23 = math.exp %22 : vector<56x128xf32>
    %cst_13 = arith.constant 1.000000e+00 : f32
    %24 = vector.broadcast %cst_13 : f32 to vector<56x128xf32>
    %25 = arith.addf %24, %23 : vector<56x128xf32>
    %cst_14 = arith.constant 1.000000e+00 : f32
    %26 = vector.broadcast %cst_14 : f32 to vector<56x128xf32>
    %27 = arith.divf %26, %25 : vector<56x128xf32>
    %cst_15 = arith.constant 0.000000e+00 : f32
    %28 = vector.broadcast %cst_15 : f32 to vector<56x128xf32>
    %29 = arith.cmpf oge, %19, %28 : vector<56x128xf32>
    %cst_16 = arith.constant 1.000000e+00 : f32
    %30 = vector.broadcast %cst_16 : f32 to vector<56x128xf32>
    %31 = arith.subf %30, %27 : vector<56x128xf32>
    %32 = arith.select %29, %27, %31 : vector<56x128xi1>, vector<56x128xf32>
    %33 = arith.addf %16, %32 : vector<56x128xf32>
    %c2 = arith.constant 2 : index
    %c0_17 = arith.constant 0 : index
    %c0_18 = arith.constant 0 : index
    %34 = vector.load %arg1[%c2, %c0_17, %c0_18] : memref<4x56x256xf32, #tpu.memory_space<vmem>>, vector<1x56x256xf32>
    %35 = vector.shape_cast %34 : vector<1x56x256xf32> to vector<56x256xf32>
    %cst_19 = arith.constant dense<0.000000e+00> : vector<56x128xf32>
    %36 = tpu.matmul %35, %0, %cst_19 {dimension_numbers = #tpu.dot_dimension_numbers<[1], [0], [0], [1], [0, 0, 1, 1], [], []>} : vector<56x256xf32>, vector<256x128xf32>, vector<56x128xf32> -> vector<56x128xf32>
    %37 = math.absf %36 : vector<56x128xf32>
    %cst_20 = arith.constant 0.000000e+00 : f32
    %38 = vector.broadcast %cst_20 : f32 to vector<56x128xf32>
    %39 = arith.subf %38, %37 : vector<56x128xf32>
    %40 = math.exp %39 : vector<56x128xf32>
    %cst_21 = arith.constant 1.000000e+00 : f32
    %41 = vector.broadcast %cst_21 : f32 to vector<56x128xf32>
    %42 = arith.addf %41, %40 : vector<56x128xf32>
    %cst_22 = arith.constant 1.000000e+00 : f32
    %43 = vector.broadcast %cst_22 : f32 to vector<56x128xf32>
    %44 = arith.divf %43, %42 : vector<56x128xf32>
    %cst_23 = arith.constant 0.000000e+00 : f32
    %45 = vector.broadcast %cst_23 : f32 to vector<56x128xf32>
    %46 = arith.cmpf oge, %36, %45 : vector<56x128xf32>
    %cst_24 = arith.constant 1.000000e+00 : f32
    %47 = vector.broadcast %cst_24 : f32 to vector<56x128xf32>
    %48 = arith.subf %47, %44 : vector<56x128xf32>
    %49 = arith.select %46, %44, %48 : vector<56x128xi1>, vector<56x128xf32>
    %50 = arith.addf %33, %49 : vector<56x128xf32>
    %c3 = arith.constant 3 : index
    %c0_25 = arith.constant 0 : index
    %c0_26 = arith.constant 0 : index
    %51 = vector.load %arg1[%c3, %c0_25, %c0_26] : memref<4x56x256xf32, #tpu.memory_space<vmem>>, vector<1x56x256xf32>
    %52 = vector.shape_cast %51 : vector<1x56x256xf32> to vector<56x256xf32>
    %cst_27 = arith.constant dense<0.000000e+00> : vector<56x128xf32>
    %53 = tpu.matmul %52, %0, %cst_27 {dimension_numbers = #tpu.dot_dimension_numbers<[1], [0], [0], [1], [0, 0, 1, 1], [], []>} : vector<56x256xf32>, vector<256x128xf32>, vector<56x128xf32> -> vector<56x128xf32>
    %54 = math.absf %53 : vector<56x128xf32>
    %cst_28 = arith.constant 0.000000e+00 : f32
    %55 = vector.broadcast %cst_28 : f32 to vector<56x128xf32>
    %56 = arith.subf %55, %54 : vector<56x128xf32>
    %57 = math.exp %56 : vector<56x128xf32>
    %cst_29 = arith.constant 1.000000e+00 : f32
    %58 = vector.broadcast %cst_29 : f32 to vector<56x128xf32>
    %59 = arith.addf %58, %57 : vector<56x128xf32>
    %cst_30 = arith.constant 1.000000e+00 : f32
    %60 = vector.broadcast %cst_30 : f32 to vector<56x128xf32>
    %61 = arith.divf %60, %59 : vector<56x128xf32>
    %cst_31 = arith.constant 0.000000e+00 : f32
    %62 = vector.broadcast %cst_31 : f32 to vector<56x128xf32>
    %63 = arith.cmpf oge, %53, %62 : vector<56x128xf32>
    %cst_32 = arith.constant 1.000000e+00 : f32
    %64 = vector.broadcast %cst_32 : f32 to vector<56x128xf32>
    %65 = arith.subf %64, %61 : vector<56x128xf32>
    %66 = arith.select %63, %61, %65 : vector<56x128xi1>, vector<56x128xf32>
    %67 = arith.addf %50, %66 : vector<56x128xf32>
    %cst_33 = arith.constant 2.500000e-01 : f32
    %68 = vector.broadcast %cst_33 : f32 to vector<56x128xf32>
    %69 = arith.mulf %68, %67 : vector<56x128xf32>
    %c0_34 = arith.constant 0 : index
    %c0_35 = arith.constant 0 : index
    %70 = vector.load %arg3[%c0_34, %c0_35] : memref<56x128xf32, #tpu.memory_space<vmem>>, vector<56x128xf32>
    tpu.vector_store %arg3[%c0_34, %c0_35], %69 {strides = array<i32>} : memref<56x128xf32, #tpu.memory_space<vmem>>, vector<56x128xf32>,
    return
  }
  func.func @transform_0(%arg0: i32) -> (i32, i32, i32) {
    %c0_i32 = arith.constant 0 : i32
    %c0_i32_0 = arith.constant 0 : i32
    %c0_i32_1 = arith.constant 0 : i32
    return %c0_i32, %arg0, %c0_i32_0 : i32, i32, i32
  }
  func.func @transform_1(%arg0: i32) -> (i32, i32) {
    %c0_i32 = arith.constant 0 : i32
    %c0_i32_0 = arith.constant 0 : i32
    %c0_i32_1 = arith.constant 0 : i32
    return %c0_i32, %c0_i32_0 : i32, i32
  }
  func.func @transform_2(%arg0: i32) -> (i32, i32) {
    %c0_i32 = arith.constant 0 : i32
    %c0_i32_0 = arith.constant 0 : i32
    return %arg0, %c0_i32 : i32, i32
  }
}

module attributes {stable_mosaic.version = 11 : i64} {
  func.func @head_kernel(%arg0: memref<8x512xf32, #tpu.memory_space<vmem>>, %arg1: memref<512x128xf32, #tpu.memory_space<vmem>>, %arg2: memref<1x128xf32, #tpu.memory_space<vmem>>, %arg3: memref<128x128xf32, #tpu.memory_space<vmem>>, %arg4: memref<1x128xf32, #tpu.memory_space<vmem>>, %arg5: memref<128x128xf32, #tpu.memory_space<vmem>>, %arg6: memref<1x128xf32, #tpu.memory_space<vmem>>, %arg7: memref<8x128xf32, #tpu.memory_space<vmem>>, %arg8: memref<1xf32, #tpu.memory_space<smem>>) attributes {dimension_semantics = [], scalar_prefetch = 0 : i64, scratch_operands = 0 : i64, tpu.core_type = #tpu.core_type<tc>} {
    %c0 = arith.constant 0 : index
    %c0_0 = arith.constant 0 : index
    %0 = vector.load %arg0[%c0, %c0_0] : memref<8x512xf32, #tpu.memory_space<vmem>>, vector<8x512xf32>
    %c0_1 = arith.constant 0 : index
    %c0_2 = arith.constant 0 : index
    %1 = vector.load %arg1[%c0_1, %c0_2] : memref<512x128xf32, #tpu.memory_space<vmem>>, vector<512x128xf32>
    %cst = arith.constant dense<0.000000e+00> : vector<8x128xf32>
    %2 = tpu.matmul %0, %1, %cst {dimension_numbers = #tpu.dot_dimension_numbers<[1], [0], [0], [1], [0, 0, 1, 1], [], []>} : vector<8x512xf32>, vector<512x128xf32>, vector<8x128xf32> -> vector<8x128xf32>
    %c0_3 = arith.constant 0 : index
    %c0_4 = arith.constant 0 : index
    %3 = vector.load %arg2[%c0_3, %c0_4] : memref<1x128xf32, #tpu.memory_space<vmem>>, vector<1x128xf32>
    %4 = vector.broadcast %3 : vector<1x128xf32> to vector<8x128xf32>
    %5 = arith.addf %2, %4 : vector<8x128xf32>
    %c0_5 = arith.constant 0 : index
    %c0_6 = arith.constant 0 : index
    %6 = vector.load %arg3[%c0_5, %c0_6] : memref<128x128xf32, #tpu.memory_space<vmem>>, vector<128x128xf32>
    %cst_7 = arith.constant dense<0.000000e+00> : vector<8x128xf32>
    %7 = tpu.matmul %5, %6, %cst_7 {dimension_numbers = #tpu.dot_dimension_numbers<[1], [0], [0], [1], [0, 0, 1, 1], [], []>} : vector<8x128xf32>, vector<128x128xf32>, vector<8x128xf32> -> vector<8x128xf32>
    %c0_8 = arith.constant 0 : index
    %c0_9 = arith.constant 0 : index
    %8 = vector.load %arg4[%c0_8, %c0_9] : memref<1x128xf32, #tpu.memory_space<vmem>>, vector<1x128xf32>
    %9 = vector.broadcast %8 : vector<1x128xf32> to vector<8x128xf32>
    %10 = arith.addf %7, %9 : vector<8x128xf32>
    %c0_10 = arith.constant 0 : index
    %c0_11 = arith.constant 0 : index
    %11 = vector.load %arg5[%c0_10, %c0_11] : memref<128x128xf32, #tpu.memory_space<vmem>>, vector<128x128xf32>
    %cst_12 = arith.constant dense<0.000000e+00> : vector<8x128xf32>
    %12 = tpu.matmul %10, %11, %cst_12 {dimension_numbers = #tpu.dot_dimension_numbers<[1], [0], [0], [1], [0, 0, 1, 1], [], []>} : vector<8x128xf32>, vector<128x128xf32>, vector<8x128xf32> -> vector<8x128xf32>
    %c0_13 = arith.constant 0 : index
    %c0_14 = arith.constant 0 : index
    %13 = vector.load %arg6[%c0_13, %c0_14] : memref<1x128xf32, #tpu.memory_space<vmem>>, vector<1x128xf32>
    %14 = vector.broadcast %13 : vector<1x128xf32> to vector<8x128xf32>
    %15 = arith.addf %12, %14 : vector<8x128xf32>
    %16 = tpu.iota {dimensions = array<i32: 1>} : vector<8x128xi32>
    %c10_i32 = arith.constant 10 : i32
    %17 = vector.broadcast %c10_i32 : i32 to vector<8x128xi32>
    %18 = arith.cmpi slt, %16, %17 : vector<8x128xi32>
    %cst_15 = arith.constant -1.000000e+30 : f32
    %19 = vector.broadcast %cst_15 : f32 to vector<8x128xf32>
    %20 = arith.select %18, %15, %19 : vector<8x128xi1>, vector<8x128xf32>
    %cst_16 = arith.constant dense<0xFF800000> : vector<8xf32>
    %21 = vector.multi_reduction <maximumf>, %20, %cst_16 [1] : vector<8x128xf32> to vector<8xf32>
    %22 = vector.shape_cast %21 : vector<8xf32> to vector<8x1xf32>
    %23 = vector.broadcast %22 : vector<8x1xf32> to vector<8x128xf32>
    %24 = arith.subf %20, %23 : vector<8x128xf32>
    %25 = math.exp %24 : vector<8x128xf32>
    %cst_17 = arith.constant dense<0.000000e+00> : vector<8xf32>
    %26 = vector.multi_reduction <add>, %25, %cst_17 [1] : vector<8x128xf32> to vector<8xf32>
    %27 = vector.shape_cast %26 : vector<8xf32> to vector<8x1xf32>
    %28 = math.log %27 : vector<8x1xf32>
    %29 = vector.broadcast %28 : vector<8x1xf32> to vector<8x128xf32>
    %30 = arith.subf %24, %29 : vector<8x128xf32>
    %c0_18 = arith.constant 0 : index
    %c0_19 = arith.constant 0 : index
    %31 = vector.load %arg7[%c0_18, %c0_19] : memref<8x128xf32, #tpu.memory_space<vmem>>, vector<8x128xf32>
    %32 = arith.mulf %31, %30 : vector<8x128xf32>
    %33 = vector.shape_cast %32 : vector<8x128xf32> to vector<1x8x128xf32>
    %cst_20 = arith.constant dense<0.000000e+00> : vector<1xf32>
    %34 = vector.multi_reduction <add>, %33, %cst_20 [1, 2] : vector<1x8x128xf32> to vector<1xf32>
    %35 = vector.shape_cast %34 : vector<1xf32> to vector<1x1x1xf32>
    %36 = vector.extract %35[0, 0, 0] : f32 from vector<1x1x1xf32>
    %cst_21 = arith.constant 0.000000e+00 : f32
    %37 = arith.subf %cst_21, %36 : f32
    %cst_22 = arith.constant 5.000000e-01 : f32
    %38 = arith.mulf %37, %cst_22 : f32
    %c0_23 = arith.constant 0 : index
    %39 = memref.load %arg8[%c0_23] : memref<1xf32, #tpu.memory_space<smem>>
    memref.store %38, %arg8[%c0_23] : memref<1xf32, #tpu.memory_space<smem>>
    return
  }
}

</mosaic_0001>

<llo_original>
// kernel: lenet_loss_pallas.3
$region0: #{lenet_loss_pallas.3}
  #allocation0 [shape = 'u32[]', space=smem, size = 0x4, offset = 0x4, fixed_abs, tag = 'smem constant byte address 0x4 - core index']
  #allocation1 [shape = 'u32[72,128]{1,0:T(1,128)}', space=vmem, size = 0x9000, scoped, tag = 'internal scratch']
  %s0 = inlined_call_operand.vmem [shape: f32[4,392,128], index: 0, kind: input, shape index: {}]
  %s1 = inlined_call_operand.vmem [shape: f32[128,128], index: 1, kind: input, shape index: {}]
  %s2 = inlined_call_operand.vmem [shape: f32[392,128], index: 2, kind: output, shape index: {}]
  %s3 = sld [smem:[#allocation0]]
  $region79: #{lenet_loss_pallas.3} parent=0
    _
  %s5 = ssub.s32 1, %s3
  %s6 = scalar_select 0, %s5, %s3
  $region1: #{lenet_loss_pallas.3} parent=0
    #allocation2 [shape = 'u8[229376]{0}', space=vmem, size = 0x38000, scoped, tag = 'input window, operand 0']
    loop: start=0, step=1, limit=9
    $region2: #{lenet_loss_pallas.3} parent=1 // loop_pre_header
      _
    $region3: #{lenet_loss_pallas.3} parent=1 // loop_header
      %s8 = sphi 0, %s12
      %p9 = scmp.ge.s32.totalorder %s8, 9
      %s18 = sphi 0, %s20
      %s21 = sphi 0, %s18
      %s22 = sphi 0, %s21
      %s38 = sphi 0, %s22
      %s42 = sphi 0, %s42
      %s44 = sphi 0, %s42
      %s45 = sphi 0, %s44
      %s59 = sphi 0, %s45
      %s65 = sphi 0, %s67
      %s68 = sphi 0, %s65
      %s69 = sphi 0, %s68
      %s85 = sphi 0, %s69
    $region4: #{lenet_loss_pallas.3} parent=1 // loop_header_branch
      %11 = sbr.rel (%p9) target = $region8
    $region5: #{lenet_loss_pallas.3} parent=1 // loop_body
      %s13 = ssub.s32 %s8, 1
      %s14 = ssub.s32 %s8, 2
      %s15 = sadd.s32 %s8, 1
      %s16 = ssub.s32 %s8, %s15
      %p17 = scmp.eq.s32.totalorder %s16, 0
      %s19 = sadd.s32 %s18, 1
      %s20 = scalar_select %p17, %s18, %s19
      %p23 = pneg %p17
      %p24 = scmp.eq.s32.totalorder %s8, 6
      %p25 = por %p23, %p24
      %p26 = scmp.ne.s32.totalorder %s18, %s21
      %p27 = scmp.eq.s32.totalorder %s8, 0
      %p28 = por %p26, %p27
      %p29 = scmp.ne.s32.totalorder %s18, %s21
      %p30 = scmp.eq.s32.totalorder %s13, 6
      %p31 = por %p29, %p30
      %p32 = scmp.ne.s32.totalorder %s21, %s22
      %p33 = scmp.eq.s32.totalorder %s13, 0
      %p34 = por %p32, %p33
      %p35 = scmp.ne.s32.totalorder %s21, %s22
      %p36 = scmp.eq.s32.totalorder %s14, 6
      %p37 = por %p35, %p36
      %p39 = scmp.ne.s32.totalorder %s22, %s38
      %p40 = scmp.eq.s32.totalorder %s14, 0
      %p41 = por %p39, %p40
      %s43 = sadd.s32 %s42, 1
      %p46 = scmp.eq.s32.totalorder %s8, 6
      %p47 = scmp.ne.s32.totalorder %s42, %s44
      %p48 = scmp.eq.s32.totalorder %s8, 0
      %p49 = por %p47, %p48
      %p50 = scmp.ne.s32.totalorder %s42, %s44
      %p51 = scmp.eq.s32.totalorder %s13, 6
      %p52 = por %p50, %p51
      %p53 = scmp.ne.s32.totalorder %s44, %s45
      %p54 = scmp.eq.s32.totalorder %s13, 0
      %p55 = por %p53, %p54
      %p56 = scmp.ne.s32.totalorder %s44, %s45
      %p57 = scmp.eq.s32.totalorder %s14, 6
      %p58 = por %p56, %p57
      %p60 = scmp.ne.s32.totalorder %s45, %s59
      %p61 = scmp.eq.s32.totalorder %s14, 0
      %p62 = por %p60, %p61
      %s63 = ssub.s32 %s8, %s15
      %p64 = scmp.eq.s32.totalorder %s63, 0
      %s66 = sadd.s32 %s65, 1
      %s67 = scalar_select %p64, %s65, %s66
      %p70 = pneg %p64
      %p71 = scmp.eq.s32.totalorder %s8, 6
      %p72 = por %p70, %p71
      %p73 = scmp.ne.s32.totalorder %s65, %s68
      %p74 = scmp.eq.s32.totalorder %s8, 0
      %p75 = por %p73, %p74
      %p76 = scmp.ne.s32.totalorder %s65, %s68
      %p77 = scmp.eq.s32.totalorder %s13, 6
      %p78 = por %p76, %p77
      %p79 = scmp.ne.s32.totalorder %s68, %s69
      %p80 = scmp.eq.s32.totalorder %s13, 0
      %p81 = por %p79, %p80
      %p82 = scmp.ne.s32.totalorder %s68, %s69
      %p83 = scmp.eq.s32.totalorder %s14, 6
      %p84 = por %p82, %p83
      %p86 = scmp.ne.s32.totalorder %s69, %s85
      %p87 = scmp.eq.s32.totalorder %s14, 0
      %p88 = por %p86, %p87
      %p89 = scmp.le.s32.totalorder 1, %s8
      %p90 = scmp.lt.s32.totalorder %s8, 8
      %p91 = pnand %p89, %p90
      %p92 = pneg %p91
      // Predicated region
      $region9: #{lenet_loss_pallas.3} parent=5 // pred_check
        _
      $region10: #{lenet_loss_pallas.3} parent=5 // pred_check_branch
        %94 = sbr.rel (%p91) target = $region12
      $region11: #{lenet_loss_pallas.3} parent=5 // pred_region
        %s95 = ssub.s32 %s8, 1
        // Predicated region
        $region13: #{lenet_loss_pallas.3} parent=11 // pred_check
          %p96 = pneg %p55
        $region14: #{lenet_loss_pallas.3} parent=11 // pred_check_branch
          %98 = sbr.rel (%p96) target = $region16
        $region15: #{lenet_loss_pallas.3} parent=11 // pred_region
          _
        $region16: #{lenet_loss_pallas.3} parent=11 // pred_fallthru
          _
      $region12: #{lenet_loss_pallas.3} parent=5 // pred_fallthru
        _
      %p99 = scmp.lt.s32.totalorder %s8, 7
      // Predicated region
      $region17: #{lenet_loss_pallas.3} parent=5 // pred_check
        %p100 = pneg %p99
      $region18: #{lenet_loss_pallas.3} parent=5 // pred_check_branch
        %102 = sbr.rel (%p100) target = $region20
      $region19: #{lenet_loss_pallas.3} parent=5 // pred_region
        // Predicated region
        $region21: #{lenet_loss_pallas.3} parent=19 // pred_check
          %p103 = pneg %p28
        $region22: #{lenet_loss_pallas.3} parent=19 // pred_check_branch
          %105 = sbr.rel (%p103) target = $region24
        $region23: #{lenet_loss_pallas.3} parent=19 // pred_region
          %s106 = sand.u32 %s18, 1
          %s107 = sand.u32 %s18, 1
          %s108 = smul.addr %s107, 224
          %s109 = scalar_lea.vmem [#allocation2], %s108
          %s110 = smul.u32 7, %s8
          %s111 = smul.addr %s110, 8
          %s112 = scalar_lea.vmem %s0, %s111
          // Predicated region
          $region25: #{lenet_loss_pallas.3} parent=23 // pred_check
            _
          $region26: #{lenet_loss_pallas.3} parent=23 // pred_check_branch
            %114 = sbr.rel (0) target = $region28
          $region27: #{lenet_loss_pallas.3} parent=23 // pred_region
            // Predicated region
            $region29: #{lenet_loss_pallas.3} parent=27 // pred_check
              _
            $region30: #{lenet_loss_pallas.3} parent=27 // pred_check_branch
              %116 = sbr.rel (0) target = $region32
            $region31: #{lenet_loss_pallas.3} parent=27 // pred_region
              // Predicated region
              $region44: #{lenet_loss_pallas.3} parent=31 // pred_check
                _
              $region45: #{lenet_loss_pallas.3} parent=31 // pred_check_branch
                %186 = sbr.rel (0) target = $region47
              $region46: #{lenet_loss_pallas.3} parent=31 // pred_region
                loop: start=0, step=1, limit=1
                $region48: #{lenet_loss_pallas.3} parent=46 // loop_pre_header
                  _
                $region49: #{lenet_loss_pallas.3} parent=46 // loop_header
                  %s188 = sphi 0, %s192
                  %p189 = scmp.ge.s32.totalorder %s188, 1
                  %s193 = sphi %s112, %s112
                  %s194 = sphi %s109, %s109
                $region50: #{lenet_loss_pallas.3} parent=46 // loop_header_branch
                  %191 = sbr.rel (%p189) target = $region54
                $region51: #{lenet_loss_pallas.3} parent=46 // loop_body
                  %v195 = vld [vmem:[%s193] sm:$0xff]
                  %196 = vst [vmem:[%s194] sm:$0xff] %v195
                  %v197 = vld [vmem:[%s193 + $0x8] sm:$0xff]
                  %198 = vst [vmem:[%s194 + $0x8] sm:$0xff] %v197
                  %v199 = vld [vmem:[%s193 + $0x10] sm:$0xff]
                  %200 = vst [vmem:[%s194 + $0x10] sm:$0xff] %v199
                  %v201 = vld [vmem:[%s193 + $0x18] sm:$0xff]
                  %202 = vst [vmem:[%s194 + $0x18] sm:$0xff] %v201
                  %v203 = vld [vmem:[%s193 + $0x20] sm:$0xff]
                  %204 = vst [vmem:[%s194 + $0x20] sm:$0xff] %v203
                  %v205 = vld [vmem:[%s193 + $0x28] sm:$0xff]
                  %206 = vst [vmem:[%s194 + $0x28] sm:$0xff] %v205
                  %v207 = vld [vmem:[%s193 + $0x30] sm:$0xff]
                  %208 = vst [vmem:[%s194 + $0x30] sm:$0xff] %v207
                  %v209 = vld [vmem:[%s193 + $0x188] sm:$0xff]
                  %210 = vst [vmem:[%s194 + $0x38] sm:$0xff] %v209
                  %v211 = vld [vmem:[%s193 + $0x190] sm:$0xff]
                  %212 = vst [vmem:[%s194 + $0x40] sm:$0xff] %v211
                  %v213 = vld [vmem:[%s193 + $0x198] sm:$0xff]
                  %214 = vst [vmem:[%s194 + $0x48] sm:$0xff] %v213
                  %v215 = vld [vmem:[%s193 + $0x1a0] sm:$0xff]
                  %216 = vst [vmem:[%s194 + $0x50] sm:$0xff] %v215
                  %v217 = vld [vmem:[%s193 + $0x1a8] sm:$0xff]
                  %218 = vst [vmem:[%s194 + $0x58] sm:$0xff] %v217
                  %v219 = vld [vmem:[%s193 + $0x1b0] sm:$0xff]
                  %220 = vst [vmem:[%s194 + $0x60] sm:$0xff] %v219
                  %v221 = vld [vmem:[%s193 + $0x1b8] sm:$0xff]
                  %222 = vst [vmem:[%s194 + $0x68] sm:$0xff] %v221
                  %v223 = vld [vmem:[%s193 + $0x310] sm:$0xff]
                  %224 = vst [vmem:[%s194 + $0x70] sm:$0xff] %v223
                  %v225 = vld [vmem:[%s193 + $0x318] sm:$0xff]
                  %226 = vst [vmem:[%s194 + $0x78] sm:$0xff] %v225
                  %v227 = vld [vmem:[%s193 + $0x320] sm:$0xff]
                  %228 = vst [vmem:[%s194 + $0x80] sm:$0xff] %v227
                  %v229 = vld [vmem:[%s193 + $0x328] sm:$0xff]
                  %230 = vst [vmem:[%s194 + $0x88] sm:$0xff] %v229
                  %v231 = vld [vmem:[%s193 + $0x330] sm:$0xff]
                  %232 = vst [vmem:[%s194 + $0x90] sm:$0xff] %v231
                  %v233 = vld [vmem:[%s193 + $0x338] sm:$0xff]
                  %234 = vst [vmem:[%s194 + $0x98] sm:$0xff] %v233
                  %v235 = vld [vmem:[%s193 + $0x340] sm:$0xff]
                  %236 = vst [vmem:[%s194 + $0xa0] sm:$0xff] %v235
                  %v237 = vld [vmem:[%s193 + $0x498] sm:$0xff]
                  %238 = vst [vmem:[%s194 + $0xa8] sm:$0xff] %v237
                  %v239 = vld [vmem:[%s193 + $0x4a0] sm:$0xff]
                  %240 = vst [vmem:[%s194 + $0xb0] sm:$0xff] %v239
                  %v241 = vld [vmem:[%s193 + $0x4a8] sm:$0xff]
                  %242 = vst [vmem:[%s194 + $0xb8] sm:$0xff] %v241
                  %v243 = vld [vmem:[%s193 + $0x4b0] sm:$0xff]
                  %244 = vst [vmem:[%s194 + $0xc0] sm:$0xff] %v243
                  %v245 = vld [vmem:[%s193 + $0x4b8] sm:$0xff]
                  %246 = vst [vmem:[%s194 + $0xc8] sm:$0xff] %v245
                  %v247 = vld [vmem:[%s193 + $0x4c0] sm:$0xff]
                  %248 = vst [vmem:[%s194 + $0xd0] sm:$0xff] %v247
                  %v249 = vld [vmem:[%s193 + $0x4c8] sm:$0xff]
                  %250 = vst [vmem:[%s194 + $0xd8] sm:$0xff] %v249
                $region52: #{lenet_loss_pallas.3} parent=46 // loop_footer
                  %s192 = sadd.s32 1, %s188
                $region53: #{lenet_loss_pallas.3} parent=46 // loop_footer_branch
                  %187 = sbr.rel target = $region49
                $region54: #{lenet_loss_pallas.3} parent=46 // loop_exit
                  _
              $region47: #{lenet_loss_pallas.3} parent=31 // pred_fallthru
                _
              // Predicated region
              $region55: #{lenet_loss_pallas.3} parent=31 // pred_check
                _
              $region56: #{lenet_loss_pallas.3} parent=31 // pred_check_branch
                %252 = sbr.rel target = $region58
              $region57: #{lenet_loss_pallas.3} parent=31 // pred_region
                _
              $region58: #{lenet_loss_pallas.3} parent=31 // pred_fallthru
                _
            $region32: #{lenet_loss_pallas.3} parent=27 // pred_fallthru
              _
            // Predicated region
            $region33: #{lenet_loss_pallas.3} parent=27 // pred_check
              _
            $region34: #{lenet_loss_pallas.3} parent=27 // pred_check_branch
              %118 = sbr.rel target = $region36
            $region35: #{lenet_loss_pallas.3} parent=27 // pred_region
              %s120 = ssub.s32 256, 1
              loop: start=0, step=1, limit=1
              $region37: #{lenet_loss_pallas.3} parent=35 // loop_pre_header
                _
              $region38: #{lenet_loss_pallas.3} parent=35 // loop_header
                %s122 = sphi 0, %s126
                %p123 = scmp.ge.s32.totalorder %s122, 1
                %s127 = sphi %s112, %s112
                %s128 = sphi %s109, %s109
              $region39: #{lenet_loss_pallas.3} parent=35 // loop_header_branch
                %125 = sbr.rel (%p123) target = $region43
              $region40: #{lenet_loss_pallas.3} parent=35 // loop_body
                %v129 = vld [vmem:[%s127] sm:%s120]
                %130 = vst [vmem:[%s128] sm:%s120] %v129
                %v131 = vld [vmem:[%s127 + $0x8] sm:%s120]
                %132 = vst [vmem:[%s128 + $0x8] sm:%s120] %v131
                %v133 = vld [vmem:[%s127 + $0x10] sm:%s120]
                %134 = vst [vmem:[%s128 + $0x10] sm:%s120] %v133
                %v135 = vld [vmem:[%s127 + $0x18] sm:%s120]
                %136 = vst [vmem:[%s128 + $0x18] sm:%s120] %v135
                %v137 = vld [vmem:[%s127 + $0x20] sm:%s120]
                %138 = vst [vmem:[%s128 + $0x20] sm:%s120] %v137
                %v139 = vld [vmem:[%s127 + $0x28] sm:%s120]
                %140 = vst [vmem:[%s128 + $0x28] sm:%s120] %v139
                %v141 = vld [vmem:[%s127 + $0x30] sm:%s120]
                %142 = vst [vmem:[%s128 + $0x30] sm:%s120] %v141
                %v143 = vld [vmem:[%s127 + $0x188] sm:%s120]
                %144 = vst [vmem:[%s128 + $0x38] sm:%s120] %v143
                %v145 = vld [vmem:[%s127 + $0x190] sm:%s120]
                %146 = vst [vmem:[%s128 + $0x40] sm:%s120] %v145
                %v147 = vld [vmem:[%s127 + $0x198] sm:%s120]
                %148 = vst [vmem:[%s128 + $0x48] sm:%s120] %v147
                %v149 = vld [vmem:[%s127 + $0x1a0] sm:%s120]
                %150 = vst [vmem:[%s128 + $0x50] sm:%s120] %v149
                %v151 = vld [vmem:[%s127 + $0x1a8] sm:%s120]
                %152 = vst [vmem:[%s128 + $0x58] sm:%s120] %v151
                %v153 = vld [vmem:[%s127 + $0x1b0] sm:%s120]
                %154 = vst [vmem:[%s128 + $0x60] sm:%s120] %v153
                %v155 = vld [vmem:[%s127 + $0x1b8] sm:%s120]
                %156 = vst [vmem:[%s128 + $0x68] sm:%s120] %v155
                %v157 = vld [vmem:[%s127 + $0x310] sm:%s120]
                %158 = vst [vmem:[%s128 + $0x70] sm:%s120] %v157
                %v159 = vld [vmem:[%s127 + $0x318] sm:%s120]
                %160 = vst [vmem:[%s128 + $0x78] sm:%s120] %v159
                %v161 = vld [vmem:[%s127 + $0x320] sm:%s120]
                %162 = vst [vmem:[%s128 + $0x80] sm:%s120] %v161
                %v163 = vld [vmem:[%s127 + $0x328] sm:%s120]
                %164 = vst [vmem:[%s128 + $0x88] sm:%s120] %v163
                %v165 = vld [vmem:[%s127 + $0x330] sm:%s120]
                %166 = vst [vmem:[%s128 + $0x90] sm:%s120] %v165
                %v167 = vld [vmem:[%s127 + $0x338] sm:%s120]
                %168 = vst [vmem:[%s128 + $0x98] sm:%s120] %v167
                %v169 = vld [vmem:[%s127 + $0x340] sm:%s120]
                %170 = vst [vmem:[%s128 + $0xa0] sm:%s120] %v169
                %v171 = vld [vmem:[%s127 + $0x498] sm:%s120]
                %172 = vst [vmem:[%s128 + $0xa8] sm:%s120] %v171
                %v173 = vld [vmem:[%s127 + $0x4a0] sm:%s120]
                %174 = vst [vmem:[%s128 + $0xb0] sm:%s120] %v173
                %v175 = vld [vmem:[%s127 + $0x4a8] sm:%s120]
                %176 = vst [vmem:[%s128 + $0xb8] sm:%s120] %v175
                %v177 = vld [vmem:[%s127 + $0x4b0] sm:%s120]
                %178 = vst [vmem:[%s128 + $0xc0] sm:%s120] %v177
                %v179 = vld [vmem:[%s127 + $0x4b8] sm:%s120]
                %180 = vst [vmem:[%s128 + $0xc8] sm:%s120] %v179
                %v181 = vld [vmem:[%s127 + $0x4c0] sm:%s120]
                %182 = vst [vmem:[%s128 + $0xd0] sm:%s120] %v181
                %v183 = vld [vmem:[%s127 + $0x4c8] sm:%s120]
                %184 = vst [vmem:[%s128 + $0xd8] sm:%s120] %v183
              $region41: #{lenet_loss_pallas.3} parent=35 // loop_footer
                %s126 = sadd.s32 1, %s122
              $region42: #{lenet_loss_pallas.3} parent=35 // loop_footer_branch
                %121 = sbr.rel target = $region38
              $region43: #{lenet_loss_pallas.3} parent=35 // loop_exit
                _
            $region36: #{lenet_loss_pallas.3} parent=27 // pred_fallthru
              _
          $region28: #{lenet_loss_pallas.3} parent=23 // pred_fallthru
            _
          %253 = vnop
        $region24: #{lenet_loss_pallas.3} parent=19 // pred_fallthru
          _
      $region20: #{lenet_loss_pallas.3} parent=5 // pred_fallthru
        _
      %p254 = scmp.le.s32.totalorder 1, %s8
      %p255 = scmp.lt.s32.totalorder %s8, 8
      %p256 = pnand %p254, %p255
      %p257 = pneg %p256
      // Predicated region
      $region59: #{lenet_loss_pallas.3} parent=5 // pred_check
        _
      $region60: #{lenet_loss_pallas.3} parent=5 // pred_check_branch
        %259 = sbr.rel (%p256) target = $region62
      $region61: #{lenet_loss_pallas.3} parent=5 // pred_region
        %s260 = ssub.s32 %s8, 1
        %s261 = sand.u32 %s21, 1
        %s262 = sand.u32 %s21, 1
        %s263 = smul.addr %s262, 224
        %s264 = scalar_lea.vmem [#allocation2], %s263
        // Predicated region
        $region63: #{lenet_loss_pallas.3} parent=61 // pred_check
          %p265 = pneg %p34
        $region64: #{lenet_loss_pallas.3} parent=61 // pred_check_branch
          %267 = sbr.rel (%p265) target = $region66
        $region65: #{lenet_loss_pallas.3} parent=61 // pred_region
          _
        $region66: #{lenet_loss_pallas.3} parent=61 // pred_fallthru
          _
        %s268 = sand.u32 %s21, 1
        %s269 = sand.u32 %s21, 1
        %s270 = smul.addr %s269, 224
        %s271 = scalar_lea.vmem [#allocation2], %s270
        %p272 = pneg %p34
        %p273 = pneg %p31
        %p274 = pneg %p55
        %p275 = pneg %p52
        %p276 = pneg %p81
        %p277 = pneg %p78
        %s278 = smul.u32 7, %s13
        %p279 = scmp.lt.s32.totalorder %s278, 48
        %s280 = scalar_select %p279, %s278, 48
        %s281 = smul.addr %s280, 8
        %s282 = scalar_lea.vmem %s2, %s281
        %s283 = smul.u32 7, %s13
        %s284 = smul.u32 7, %s13
        %p285 = scmp.lt.s32.totalorder %s284, 48
        %s286 = scalar_select %p285, %s284, 48
        %s287 = smul.addr %s286, 8
        %s288 = scalar_lea.vmem %s2, %s287
        %s289 = smul.u32 7, %s13
        %v290 = vld [vmem:[%s1] sm:$0xff]
        %v291 = vld [vmem:[%s1 + $0x8] sm:$0xff]
        %v292 = vld [vmem:[%s1 + $0x10] sm:$0xff]
        %v293 = vld [vmem:[%s1 + $0x18] sm:$0xff]
        %v294 = vld [vmem:[%s1 + $0x20] sm:$0xff]
        %v295 = vld [vmem:[%s1 + $0x28] sm:$0xff]
        %v296 = vld [vmem:[%s1 + $0x30] sm:$0xff]
        %v297 = vld [vmem:[%s1 + $0x38] sm:$0xff]
        %v298 = vld [vmem:[%s1 + $0x40] sm:$0xff]
        %v299 = vld [vmem:[%s1 + $0x48] sm:$0xff]
        %v300 = vld [vmem:[%s1 + $0x50] sm:$0xff]
        %v301 = vld [vmem:[%s1 + $0x58] sm:$0xff]
        %v302 = vld [vmem:[%s1 + $0x60] sm:$0xff]
        %v303 = vld [vmem:[%s1 + $0x68] sm:$0xff]
        %v304 = vld [vmem:[%s1 + $0x70] sm:$0xff]
        %v305 = vld [vmem:[%s1 + $0x78] sm:$0xff]
        %v306 = vld [vmem:[%s264] sm:$0xff]
        %v307 = vld [vmem:[%s264 + $0x8] sm:$0xff]
        %v308 = vld [vmem:[%s264 + $0x10] sm:$0xff]
        %v309 = vld [vmem:[%s264 + $0x18] sm:$0xff]
        %v310 = vld [vmem:[%s264 + $0x20] sm:$0xff]
        %v311 = vld [vmem:[%s264 + $0x28] sm:$0xff]
        %v312 = vld [vmem:[%s264 + $0x30] sm:$0xff]
        %313 = vmatpush.msra.mxu0 %v305
        %314 = vmatpush.msra.mxu0 %v304
        %315 = vmatpush.msra.mxu0 %v303
        %316 = vmatpush.msra.mxu0 %v302
        %317 = vmatpush.msra.mxu0 %v301
        %318 = vmatpush.msra.mxu0 %v300
        %319 = vmatpush.msra.mxu0 %v299
        %320 = vmatpush.msra.mxu0 %v298
        %321 = vmatpush.msra.mxu0 %v297
        %322 = vmatpush.msra.mxu0 %v296
        %323 = vmatpush.msra.mxu0 %v295
        %324 = vmatpush.msra.mxu0 %v294
        %325 = vmatpush.msra.mxu0 %v293
        %326 = vmatpush.msra.mxu0 %v292
        %327 = vmatpush.msra.mxu0 %v291
        %328 = vmatpush.msra.mxu0 %v290
        %329 = vmatmul.f32.gmra.mxu0 %v306
        %v330 = vpop.f32.mrf.mxu0
        %v331 = vadd.f32 0.0, %v330
        %332 = vmatmul.f32.gmra.mxu0 %v307
        %v333 = vpop.f32.mrf.mxu0
        %v334 = vadd.f32 0.0, %v333
        %335 = vmatmul.f32.gmra.mxu0 %v308
        %v336 = vpop.f32.mrf.mxu0
        %v337 = vadd.f32 0.0, %v336
        %338 = vmatmul.f32.gmra.mxu0 %v309
        %v339 = vpop.f32.mrf.mxu0
        %v340 = vadd.f32 0.0, %v339
        %341 = vmatmul.f32.gmra.mxu0 %v310
        %v342 = vpop.f32.mrf.mxu0
        %v343 = vadd.f32 0.0, %v342
        %344 = vmatmul.f32.gmra.mxu0 %v311
        %v345 = vpop.f32.mrf.mxu0
        %v346 = vadd.f32 0.0, %v345
        %347 = vmatmul.f32.gmra.mxu0 %v312
        %v348 = vpop.f32.mrf.mxu0
        %v349 = vadd.f32 0.0, %v348
        %350 = vdwg.mxu0
        %v351 = vand.u32 2147483647, %v331
        %v352 = vand.u32 2147483647, %v334
        %v353 = vand.u32 2147483647, %v337
        %v354 = vand.u32 2147483647, %v340
        %v355 = vand.u32 2147483647, %v343
        %v356 = vand.u32 2147483647, %v346
        %v357 = vand.u32 2147483647, %v349
        %v358 = vsub.f32 0.0, %v351
        %v359 = vsub.f32 0.0, %v352
        %v360 = vsub.f32 0.0, %v353
        %v361 = vsub.f32 0.0, %v354
        %v362 = vsub.f32 0.0, %v355
        %v363 = vsub.f32 0.0, %v356
        %v364 = vsub.f32 0.0, %v357
        %v365 = vmul.f32 %v358, 1.442695
        %v366 = vpow.pop %v365
        %v367 = vmul.f32 %v359, 1.442695
        %v368 = vpow.pop %v367
        %v369 = vmul.f32 %v360, 1.442695
        %v370 = vpow.pop %v369
        %v371 = vmul.f32 %v361, 1.442695
        %v372 = vpow.pop %v371
        %v373 = vmul.f32 %v362, 1.442695
        %v374 = vpow.pop %v373
        %v375 = vmul.f32 %v363, 1.442695
        %v376 = vpow.pop %v375
        %v377 = vmul.f32 %v364, 1.442695
        %v378 = vpow.pop %v377
        %v379 = vadd.f32 %v366, 1.0
        %v380 = vadd.f32 %v368, 1.0
        %v381 = vadd.f32 %v370, 1.0
        %v382 = vadd.f32 %v372, 1.0
        %v383 = vadd.f32 %v374, 1.0
        %v384 = vadd.f32 %v376, 1.0
        %v385 = vadd.f32 %v378, 1.0
        %v386 = vrcp.pop %v379
        %v387 = vmul.f32 %v379, %v386
        %v388 = vsub.f32 1.0, %v387
        %v389 = vmul.f32 %v386, %v388
        %v390 = vadd.f32 %v386, %v389
        %vm391 = vweird.f32 %v379
        %vm392 = vweird.f32 %v386
        %vm393 = vmor %vm391, %vm392
        %v394 = vsel %vm393, %v386, %v390
        %v395 = vand.u32 2147483647, %v379
        %vm396 = vcmp.eq.f32.partialorder %v395, 8.507059e+37
        %v397 = vand.u32 %v379, 2147483648
        %v398 = vor.u32 1.1754944e-38, %v397
        %v399 = vsel %vm396, %v398, %v394
        %v400 = vmul.f32 1.0, %v399
        %v401 = vrcp.pop %v380
        %v402 = vmul.f32 %v380, %v401
        %v403 = vsub.f32 1.0, %v402
        %v404 = vmul.f32 %v401, %v403
        %v405 = vadd.f32 %v401, %v404
        %vm406 = vweird.f32 %v380
        %vm407 = vweird.f32 %v401
        %vm408 = vmor %vm406, %vm407
        %v409 = vsel %vm408, %v401, %v405
        %v410 = vand.u32 2147483647, %v380
        %vm411 = vcmp.eq.f32.partialorder %v410, 8.507059e+37
        %v412 = vand.u32 %v380, 2147483648
        %v413 = vor.u32 1.1754944e-38, %v412
        %v414 = vsel %vm411, %v413, %v409
        %v415 = vmul.f32 1.0, %v414
        %v416 = vrcp.pop %v381
        %v417 = vmul.f32 %v381, %v416
        %v418 = vsub.f32 1.0, %v417
        %v419 = vmul.f32 %v416, %v418
        %v420 = vadd.f32 %v416, %v419
        %vm421 = vweird.f32 %v381
        %vm422 = vweird.f32 %v416
        %vm423 = vmor %vm421, %vm422
        %v424 = vsel %vm423, %v416, %v420
        %v425 = vand.u32 2147483647, %v381
        %vm426 = vcmp.eq.f32.partialorder %v425, 8.507059e+37
        %v427 = vand.u32 %v381, 2147483648
        %v428 = vor.u32 1.1754944e-38, %v427
        %v429 = vsel %vm426, %v428, %v424
        %v430 = vmul.f32 1.0, %v429
        %v431 = vrcp.pop %v382
        %v432 = vmul.f32 %v382, %v431
        %v433 = vsub.f32 1.0, %v432
        %v434 = vmul.f32 %v431, %v433
        %v435 = vadd.f32 %v431, %v434
        %vm436 = vweird.f32 %v382
        %vm437 = vweird.f32 %v431
        %vm438 = vmor %vm436, %vm437
        %v439 = vsel %vm438, %v431, %v435
        %v440 = vand.u32 2147483647, %v382
        %vm441 = vcmp.eq.f32.partialorder %v440, 8.507059e+37
        %v442 = vand.u32 %v382, 2147483648
        %v443 = vor.u32 1.1754944e-38, %v442
        %v444 = vsel %vm441, %v443, %v439
        %v445 = vmul.f32 1.0, %v444
        %v446 = vrcp.pop %v383
        %v447 = vmul.f32 %v383, %v446
        %v448 = vsub.f32 1.0, %v447
        %v449 = vmul.f32 %v446, %v448
        %v450 = vadd.f32 %v446, %v449
        %vm451 = vweird.f32 %v383
        %vm452 = vweird.f32 %v446
        %vm453 = vmor %vm451, %vm452
        %v454 = vsel %vm453, %v446, %v450
        %v455 = vand.u32 2147483647, %v383
        %vm456 = vcmp.eq.f32.partialorder %v455, 8.507059e+37
        %v457 = vand.u32 %v383, 2147483648
        %v458 = vor.u32 1.1754944e-38, %v457
        %v459 = vsel %vm456, %v458, %v454
        %v460 = vmul.f32 1.0, %v459
        %v461 = vrcp.pop %v384
        %v462 = vmul.f32 %v384, %v461
        %v463 = vsub.f32 1.0, %v462
        %v464 = vmul.f32 %v461, %v463
        %v465 = vadd.f32 %v461, %v464
        %vm466 = vweird.f32 %v384
        %vm467 = vweird.f32 %v461
        %vm468 = vmor %vm466, %vm467
        %v469 = vsel %vm468, %v461, %v465
        %v470 = vand.u32 2147483647, %v384
        %vm471 = vcmp.eq.f32.partialorder %v470, 8.507059e+37
        %v472 = vand.u32 %v384, 2147483648
        %v473 = vor.u32 1.1754944e-38, %v472
        %v474 = vsel %vm471, %v473, %v469
        %v475 = vmul.f32 1.0, %v474
        %v476 = vrcp.pop %v385
        %v477 = vmul.f32 %v385, %v476
        %v478 = vsub.f32 1.0, %v477
        %v479 = vmul.f32 %v476, %v478
        %v480 = vadd.f32 %v476, %v479
        %vm481 = vweird.f32 %v385
        %vm482 = vweird.f32 %v476
        %vm483 = vmor %vm481, %vm482
        %v484 = vsel %vm483, %v476, %v480
        %v485 = vand.u32 2147483647, %v385
        %vm486 = vcmp.eq.f32.partialorder %v485, 8.507059e+37
        %v487 = vand.u32 %v385, 2147483648
        %v488 = vor.u32 1.1754944e-38, %v487
        %v489 = vsel %vm486, %v488, %v484
        %v490 = vmul.f32 1.0, %v489
        %vm491 = vcmp.ge.f32.partialorder %v331, 0.0
        %vm492 = vcmp.ge.f32.partialorder %v334, 0.0
        %vm493 = vcmp.ge.f32.partialorder %v337, 0.0
        %vm494 = vcmp.ge.f32.partialorder %v340, 0.0
        %vm495 = vcmp.ge.f32.partialorder %v343, 0.0
        %vm496 = vcmp.ge.f32.partialorder %v346, 0.0
        %vm497 = vcmp.ge.f32.partialorder %v349, 0.0
        %v498 = vsub.f32 1.0, %v400
        %v499 = vsub.f32 1.0, %v415
        %v500 = vsub.f32 1.0, %v430
        %v501 = vsub.f32 1.0, %v445
        %v502 = vsub.f32 1.0, %v460
        %v503 = vsub.f32 1.0, %v475
        %v504 = vsub.f32 1.0, %v490
        %v505 = vsel %vm491, %v400, %v498
        %v506 = vsel %vm492, %v415, %v499
        %v507 = vsel %vm493, %v430, %v500
        %v508 = vsel %vm494, %v445, %v501
        %v509 = vsel %vm495, %v460, %v502
        %v510 = vsel %vm496, %v475, %v503
        %v511 = vsel %vm497, %v490, %v504
        %s512 = scalar_lea.vmem %s264, 56 [#allocation2]
        %v513 = vld [vmem:[%s512] sm:$0xff]
        %v514 = vld [vmem:[%s512 + $0x8] sm:$0xff]
        %v515 = vld [vmem:[%s512 + $0x10] sm:$0xff]
        %v516 = vld [vmem:[%s512 + $0x18] sm:$0xff]
        %v517 = vld [vmem:[%s512 + $0x20] sm:$0xff]
        %v518 = vld [vmem:[%s512 + $0x28] sm:$0xff]
        %v519 = vld [vmem:[%s512 + $0x30] sm:$0xff]
        %520 = vmatpush.msra.mxu0 %v305
        %521 = vmatpush.msra.mxu0 %v304
        %522 = vmatpush.msra.mxu0 %v303
        %523 = vmatpush.msra.mxu0 %v302
        %524 = vmatpush.msra.mxu0 %v301
        %525 = vmatpush.msra.mxu0 %v300
        %526 = vmatpush.msra.mxu0 %v299
        %527 = vmatpush.msra.mxu0 %v298
        %528 = vmatpush.msra.mxu0 %v297
        %529 = vmatpush.msra.mxu0 %v296
        %530 = vmatpush.msra.mxu0 %v295
        %531 = vmatpush.msra.mxu0 %v294
        %532 = vmatpush.msra.mxu0 %v293
        %533 = vmatpush.msra.mxu0 %v292
        %534 = vmatpush.msra.mxu0 %v291
        %535 = vmatpush.msra.mxu0 %v290
        %536 = vmatmul.f32.gmra.mxu0 %v513
        %v537 = vpop.f32.mrf.mxu0
        %v538 = vadd.f32 0.0, %v537
        %539 = vmatmul.f32.gmra.mxu0 %v514
        %v540 = vpop.f32.mrf.mxu0
        %v541 = vadd.f32 0.0, %v540
        %542 = vmatmul.f32.gmra.mxu0 %v515
        %v543 = vpop.f32.mrf.mxu0
        %v544 = vadd.f32 0.0, %v543
        %545 = vmatmul.f32.gmra.mxu0 %v516
        %v546 = vpop.f32.mrf.mxu0
        %v547 = vadd.f32 0.0, %v546
        %548 = vmatmul.f32.gmra.mxu0 %v517
        %v549 = vpop.f32.mrf.mxu0
        %v550 = vadd.f32 0.0, %v549
        %551 = vmatmul.f32.gmra.mxu0 %v518
        %v552 = vpop.f32.mrf.mxu0
        %v553 = vadd.f32 0.0, %v552
        %554 = vmatmul.f32.gmra.mxu0 %v519
        %v555 = vpop.f32.mrf.mxu0
        %v556 = vadd.f32 0.0, %v555
        %557 = vdwg.mxu0
        %v558 = vand.u32 2147483647, %v538
        %v559 = vand.u32 2147483647, %v541
        %v560 = vand.u32 2147483647, %v544
        %v561 = vand.u32 2147483647, %v547
        %v562 = vand.u32 2147483647, %v550
        %v563 = vand.u32 2147483647, %v553
        %v564 = vand.u32 2147483647, %v556
        %v565 = vsub.f32 0.0, %v558
        %v566 = vsub.f32 0.0, %v559
        %v567 = vsub.f32 0.0, %v560
        %v568 = vsub.f32 0.0, %v561
        %v569 = vsub.f32 0.0, %v562
        %v570 = vsub.f32 0.0, %v563
        %v571 = vsub.f32 0.0, %v564
        %v572 = vmul.f32 %v565, 1.442695
        %v573 = vpow.pop %v572
        %v574 = vmul.f32 %v566, 1.442695
        %v575 = vpow.pop %v574
        %v576 = vmul.f32 %v567, 1.442695
        %v577 = vpow.pop %v576
        %v578 = vmul.f32 %v568, 1.442695
        %v579 = vpow.pop %v578
        %v580 = vmul.f32 %v569, 1.442695
        %v581 = vpow.pop %v580
        %v582 = vmul.f32 %v570, 1.442695
        %v583 = vpow.pop %v582
        %v584 = vmul.f32 %v571, 1.442695
        %v585 = vpow.pop %v584
        %v586 = vadd.f32 %v573, 1.0
        %v587 = vadd.f32 %v575, 1.0
        %v588 = vadd.f32 %v577, 1.0
        %v589 = vadd.f32 %v579, 1.0
        %v590 = vadd.f32 %v581, 1.0
        %v591 = vadd.f32 %v583, 1.0
        %v592 = vadd.f32 %v585, 1.0
        %v593 = vrcp.pop %v586
        %v594 = vmul.f32 %v586, %v593
        %v595 = vsub.f32 1.0, %v594
        %v596 = vmul.f32 %v593, %v595
        %v597 = vadd.f32 %v593, %v596
        %vm598 = vweird.f32 %v586
        %vm599 = vweird.f32 %v593
        %vm600 = vmor %vm598, %vm599
        %v601 = vsel %vm600, %v593, %v597
        %v602 = vand.u32 2147483647, %v586
        %vm603 = vcmp.eq.f32.partialorder %v602, 8.507059e+37
        %v604 = vand.u32 %v586, 2147483648
        %v605 = vor.u32 1.1754944e-38, %v604
        %v606 = vsel %vm603, %v605, %v601
        %v607 = vmul.f32 1.0, %v606
        %v608 = vrcp.pop %v587
        %v609 = vmul.f32 %v587, %v608
        %v610 = vsub.f32 1.0, %v609
        %v611 = vmul.f32 %v608, %v610
        %v612 = vadd.f32 %v608, %v611
        %vm613 = vweird.f32 %v587
        %vm614 = vweird.f32 %v608
        %vm615 = vmor %vm613, %vm614
        %v616 = vsel %vm615, %v608, %v612
        %v617 = vand.u32 2147483647, %v587
        %vm618 = vcmp.eq.f32.partialorder %v617, 8.507059e+37
        %v619 = vand.u32 %v587, 2147483648
        %v620 = vor.u32 1.1754944e-38, %v619
        %v621 = vsel %vm618, %v620, %v616
        %v622 = vmul.f32 1.0, %v621
        %v623 = vrcp.pop %v588
        %v624 = vmul.f32 %v588, %v623
        %v625 = vsub.f32 1.0, %v624
        %v626 = vmul.f32 %v623, %v625
        %v627 = vadd.f32 %v623, %v626
        %vm628 = vweird.f32 %v588
        %vm629 = vweird.f32 %v623
        %vm630 = vmor %vm628, %vm629
        %v631 = vsel %vm630, %v623, %v627
        %v632 = vand.u32 2147483647, %v588
        %vm633 = vcmp.eq.f32.partialorder %v632, 8.507059e+37
        %v634 = vand.u32 %v588, 2147483648
        %v635 = vor.u32 1.1754944e-38, %v634
        %v636 = vsel %vm633, %v635, %v631
        %v637 = vmul.f32 1.0, %v636
        %v638 = vrcp.pop %v589
        %v639 = vmul.f32 %v589, %v638
        %v640 = vsub.f32 1.0, %v639
        %v641 = vmul.f32 %v638, %v640
        %v642 = vadd.f32 %v638, %v641
        %vm643 = vweird.f32 %v589
        %vm644 = vweird.f32 %v638
        %vm645 = vmor %vm643, %vm644
        %v646 = vsel %vm645, %v638, %v642
        %v647 = vand.u32 2147483647, %v589
        %vm648 = vcmp.eq.f32.partialorder %v647, 8.507059e+37
        %v649 = vand.u32 %v589, 2147483648
        %v650 = vor.u32 1.1754944e-38, %v649
        %v651 = vsel %vm648, %v650, %v646
        %v652 = vmul.f32 1.0, %v651
        %v653 = vrcp.pop %v590
        %v654 = vmul.f32 %v590, %v653
        %v655 = vsub.f32 1.0, %v654
        %v656 = vmul.f32 %v653, %v655
        %v657 = vadd.f32 %v653, %v656
        %vm658 = vweird.f32 %v590
        %vm659 = vweird.f32 %v653
        %vm660 = vmor %vm658, %vm659
        %v661 = vsel %vm660, %v653, %v657
        %v662 = vand.u32 2147483647, %v590
        %vm663 = vcmp.eq.f32.partialorder %v662, 8.507059e+37
        %v664 = vand.u32 %v590, 2147483648
        %v665 = vor.u32 1.1754944e-38, %v664
        %v666 = vsel %vm663, %v665, %v661
        %v667 = vmul.f32 1.0, %v666
        %v668 = vrcp.pop %v591
        %v669 = vmul.f32 %v591, %v668
        %v670 = vsub.f32 1.0, %v669
        %v671 = vmul.f32 %v668, %v670
        %v672 = vadd.f32 %v668, %v671
        %vm673 = vweird.f32 %v591
        %vm674 = vweird.f32 %v668
        %vm675 = vmor %vm673, %vm674
        %v676 = vsel %vm675, %v668, %v672
        %v677 = vand.u32 2147483647, %v591
        %vm678 = vcmp.eq.f32.partialorder %v677, 8.507059e+37
        %v679 = vand.u32 %v591, 2147483648
        %v680 = vor.u32 1.1754944e-38, %v679
        %v681 = vsel %vm678, %v680, %v676
        %v682 = vmul.f32 1.0, %v681
        %v683 = vrcp.pop %v592
        %v684 = vmul.f32 %v592, %v683
        %v685 = vsub.f32 1.0, %v684
        %v686 = vmul.f32 %v683, %v685
        %v687 = vadd.f32 %v683, %v686
        %vm688 = vweird.f32 %v592
        %vm689 = vweird.f32 %v683
        %vm690 = vmor %vm688, %vm689
        %v691 = vsel %vm690, %v683, %v687
        %v692 = vand.u32 2147483647, %v592
        %vm693 = vcmp.eq.f32.partialorder %v692, 8.507059e+37
        %v694 = vand.u32 %v592, 2147483648
        %v695 = vor.u32 1.1754944e-38, %v694
        %v696 = vsel %vm693, %v695, %v691
        %v697 = vmul.f32 1.0, %v696
        %vm698 = vcmp.ge.f32.partialorder %v538, 0.0
        %vm699 = vcmp.ge.f32.partialorder %v541, 0.0
        %vm700 = vcmp.ge.f32.partialorder %v544, 0.0
        %vm701 = vcmp.ge.f32.partialorder %v547, 0.0
        %vm702 = vcmp.ge.f32.partialorder %v550, 0.0
        %vm703 = vcmp.ge.f32.partialorder %v553, 0.0
        %vm704 = vcmp.ge.f32.partialorder %v556, 0.0
        %v705 = vsub.f32 1.0, %v607
        %v706 = vsub.f32 1.0, %v622
        %v707 = vsub.f32 1.0, %v637
        %v708 = vsub.f32 1.0, %v652
        %v709 = vsub.f32 1.0, %v667
        %v710 = vsub.f32 1.0, %v682
        %v711 = vsub.f32 1.0, %v697
        %v712 = vsel %vm698, %v607, %v705
        %v713 = vsel %vm699, %v622, %v706
        %v714 = vsel %vm700, %v637, %v707
        %v715 = vsel %vm701, %v652, %v708
        %v716 = vsel %vm702, %v667, %v709
        %v717 = vsel %vm703, %v682, %v710
        %v718 = vsel %vm704, %v697, %v711
        %v719 = vadd.f32 %v505, %v712
        %v720 = vadd.f32 %v506, %v713
        %v721 = vadd.f32 %v507, %v714
        %v722 = vadd.f32 %v508, %v715
        %v723 = vadd.f32 %v509, %v716
        %v724 = vadd.f32 %v510, %v717
        %v725 = vadd.f32 %v511, %v718
        %s726 = scalar_lea.vmem %s264, 112 [#allocation2]
        %v727 = vld [vmem:[%s726] sm:$0xff]
        %v728 = vld [vmem:[%s726 + $0x8] sm:$0xff]
        %v729 = vld [vmem:[%s726 + $0x10] sm:$0xff]
        %v730 = vld [vmem:[%s726 + $0x18] sm:$0xff]
        %v731 = vld [vmem:[%s726 + $0x20] sm:$0xff]
        %v732 = vld [vmem:[%s726 + $0x28] sm:$0xff]
        %v733 = vld [vmem:[%s726 + $0x30] sm:$0xff]
        %734 = vmatpush.msra.mxu0 %v305
        %735 = vmatpush.msra.mxu0 %v304
        %736 = vmatpush.msra.mxu0 %v303
        %737 = vmatpush.msra.mxu0 %v302
        %738 = vmatpush.msra.mxu0 %v301
        %739 = vmatpush.msra.mxu0 %v300
        %740 = vmatpush.msra.mxu0 %v299
        %741 = vmatpush.msra.mxu0 %v298
        %742 = vmatpush.msra.mxu0 %v297
        %743 = vmatpush.msra.mxu0 %v296
        %744 = vmatpush.msra.mxu0 %v295
        %745 = vmatpush.msra.mxu0 %v294
        %746 = vmatpush.msra.mxu0 %v293
        %747 = vmatpush.msra.mxu0 %v292
        %748 = vmatpush.msra.mxu0 %v291
        %749 = vmatpush.msra.mxu0 %v290
        %750 = vmatmul.f32.gmra.mxu0 %v727
        %v751 = vpop.f32.mrf.mxu0
        %v752 = vadd.f32 0.0, %v751
        %753 = vmatmul.f32.gmra.mxu0 %v728
        %v754 = vpop.f32.mrf.mxu0
        %v755 = vadd.f32 0.0, %v754
        %756 = vmatmul.f32.gmra.mxu0 %v729
        %v757 = vpop.f32.mrf.mxu0
        %v758 = vadd.f32 0.0, %v757
        %759 = vmatmul.f32.gmra.mxu0 %v730
        %v760 = vpop.f32.mrf.mxu0
        %v761 = vadd.f32 0.0, %v760
        %762 = vmatmul.f32.gmra.mxu0 %v731
        %v763 = vpop.f32.mrf.mxu0
        %v764 = vadd.f32 0.0, %v763
        %765 = vmatmul.f32.gmra.mxu0 %v732
        %v766 = vpop.f32.mrf.mxu0
        %v767 = vadd.f32 0.0, %v766
        %768 = vmatmul.f32.gmra.mxu0 %v733
        %v769 = vpop.f32.mrf.mxu0
        %v770 = vadd.f32 0.0, %v769
        %771 = vdwg.mxu0
        %v772 = vand.u32 2147483647, %v752
        %v773 = vand.u32 2147483647, %v755
        %v774 = vand.u32 2147483647, %v758
        %v775 = vand.u32 2147483647, %v761
        %v776 = vand.u32 2147483647, %v764
        %v777 = vand.u32 2147483647, %v767
        %v778 = vand.u32 2147483647, %v770
        %v779 = vsub.f32 0.0, %v772
        %v780 = vsub.f32 0.0, %v773
        %v781 = vsub.f32 0.0, %v774
        %v782 = vsub.f32 0.0, %v775
        %v783 = vsub.f32 0.0, %v776
        %v784 = vsub.f32 0.0, %v777
        %v785 = vsub.f32 0.0, %v778
        %v786 = vmul.f32 %v779, 1.442695
        %v787 = vpow.pop %v786
        %v788 = vmul.f32 %v780, 1.442695
        %v789 = vpow.pop %v788
        %v790 = vmul.f32 %v781, 1.442695
        %v791 = vpow.pop %v790
        %v792 = vmul.f32 %v782, 1.442695
        %v793 = vpow.pop %v792
        %v794 = vmul.f32 %v783, 1.442695
        %v795 = vpow.pop %v794
        %v796 = vmul.f32 %v784, 1.442695
        %v797 = vpow.pop %v796
        %v798 = vmul.f32 %v785, 1.442695
        %v799 = vpow.pop %v798
        %v800 = vadd.f32 %v787, 1.0
        %v801 = vadd.f32 %v789, 1.0
        %v802 = vadd.f32 %v791, 1.0
        %v803 = vadd.f32 %v793, 1.0
        %v804 = vadd.f32 %v795, 1.0
        %v805 = vadd.f32 %v797, 1.0
        %v806 = vadd.f32 %v799, 1.0
        %v807 = vrcp.pop %v800
        %v808 = vmul.f32 %v800, %v807
        %v809 = vsub.f32 1.0, %v808
        %v810 = vmul.f32 %v807, %v809
        %v811 = vadd.f32 %v807, %v810
        %vm812 = vweird.f32 %v800
        %vm813 = vweird.f32 %v807
        %vm814 = vmor %vm812, %vm813
        %v815 = vsel %vm814, %v807, %v811
        %v816 = vand.u32 2147483647, %v800
        %vm817 = vcmp.eq.f32.partialorder %v816, 8.507059e+37
        %v818 = vand.u32 %v800, 2147483648
        %v819 = vor.u32 1.1754944e-38, %v818
        %v820 = vsel %vm817, %v819, %v815
        %v821 = vmul.f32 1.0, %v820
        %v822 = vrcp.pop %v801
        %v823 = vmul.f32 %v801, %v822
        %v824 = vsub.f32 1.0, %v823
        %v825 = vmul.f32 %v822, %v824
        %v826 = vadd.f32 %v822, %v825
        %vm827 = vweird.f32 %v801
        %vm828 = vweird.f32 %v822
        %vm829 = vmor %vm827, %vm828
        %v830 = vsel %vm829, %v822, %v826
        %v831 = vand.u32 2147483647, %v801
        %vm832 = vcmp.eq.f32.partialorder %v831, 8.507059e+37
        %v833 = vand.u32 %v801, 2147483648
        %v834 = vor.u32 1.1754944e-38, %v833
        %v835 = vsel %vm832, %v834, %v830
        %v836 = vmul.f32 1.0, %v835
        %v837 = vrcp.pop %v802
        %v838 = vmul.f32 %v802, %v837
        %v839 = vsub.f32 1.0, %v838
        %v840 = vmul.f32 %v837, %v839
        %v841 = vadd.f32 %v837, %v840
        %vm842 = vweird.f32 %v802
        %vm843 = vweird.f32 %v837
        %vm844 = vmor %vm842, %vm843
        %v845 = vsel %vm844, %v837, %v841
        %v846 = vand.u32 2147483647, %v802
        %vm847 = vcmp.eq.f32.partialorder %v846, 8.507059e+37
        %v848 = vand.u32 %v802, 2147483648
        %v849 = vor.u32 1.1754944e-38, %v848
        %v850 = vsel %vm847, %v849, %v845
        %v851 = vmul.f32 1.0, %v850
        %v852 = vrcp.pop %v803
        %v853 = vmul.f32 %v803, %v852
        %v854 = vsub.f32 1.0, %v853
        %v855 = vmul.f32 %v852, %v854
        %v856 = vadd.f32 %v852, %v855
        %vm857 = vweird.f32 %v803
        %vm858 = vweird.f32 %v852
        %vm859 = vmor %vm857, %vm858
        %v860 = vsel %vm859, %v852, %v856
        %v861 = vand.u32 2147483647, %v803
        %vm862 = vcmp.eq.f32.partialorder %v861, 8.507059e+37
        %v863 = vand.u32 %v803, 2147483648
        %v864 = vor.u32 1.1754944e-38, %v863
        %v865 = vsel %vm862, %v864, %v860
        %v866 = vmul.f32 1.0, %v865
        %v867 = vrcp.pop %v804
        %v868 = vmul.f32 %v804, %v867
        %v869 = vsub.f32 1.0, %v868
        %v870 = vmul.f32 %v867, %v869
        %v871 = vadd.f32 %v867, %v870
        %vm872 = vweird.f32 %v804
        %vm873 = vweird.f32 %v867
        %vm874 = vmor %vm872, %vm873
        %v875 = vsel %vm874, %v867, %v871
        %v876 = vand.u32 2147483647, %v804
        %vm877 = vcmp.eq.f32.partialorder %v876, 8.507059e+37
        %v878 = vand.u32 %v804, 2147483648
        %v879 = vor.u32 1.1754944e-38, %v878
        %v880 = vsel %vm877, %v879, %v875
        %v881 = vmul.f32 1.0, %v880
        %v882 = vrcp.pop %v805
        %v883 = vmul.f32 %v805, %v882
        %v884 = vsub.f32 1.0, %v883
        %v885 = vmul.f32 %v882, %v884
        %v886 = vadd.f32 %v882, %v885
        %vm887 = vweird.f32 %v805
        %vm888 = vweird.f32 %v882
        %vm889 = vmor %vm887, %vm888
        %v890 = vsel %vm889, %v882, %v886
        %v891 = vand.u32 2147483647, %v805
        %vm892 = vcmp.eq.f32.partialorder %v891, 8.507059e+37
        %v893 = vand.u32 %v805, 2147483648
        %v894 = vor.u32 1.1754944e-38, %v893
        %v895 = vsel %vm892, %v894, %v890
        %v896 = vmul.f32 1.0, %v895
        %v897 = vrcp.pop %v806
        %v898 = vmul.f32 %v806, %v897
        %v899 = vsub.f32 1.0, %v898
        %v900 = vmul.f32 %v897, %v899
        %v901 = vadd.f32 %v897, %v900
        %vm902 = vweird.f32 %v806
        %vm903 = vweird.f32 %v897
        %vm904 = vmor %vm902, %vm903
        %v905 = vsel %vm904, %v897, %v901
        %v906 = vand.u32 2147483647, %v806
        %vm907 = vcmp.eq.f32.partialorder %v906, 8.507059e+37
        %v908 = vand.u32 %v806, 2147483648
        %v909 = vor.u32 1.1754944e-38, %v908
        %v910 = vsel %vm907, %v909, %v905
        %v911 = vmul.f32 1.0, %v910
        %vm912 = vcmp.ge.f32.partialorder %v752, 0.0
        %vm913 = vcmp.ge.f32.partialorder %v755, 0.0
        %vm914 = vcmp.ge.f32.partialorder %v758, 0.0
        %vm915 = vcmp.ge.f32.partialorder %v761, 0.0
        %vm916 = vcmp.ge.f32.partialorder %v764, 0.0
        %vm917 = vcmp.ge.f32.partialorder %v767, 0.0
        %vm918 = vcmp.ge.f32.partialorder %v770, 0.0
        %v919 = vsub.f32 1.0, %v821
        %v920 = vsub.f32 1.0, %v836
        %v921 = vsub.f32 1.0, %v851
        %v922 = vsub.f32 1.0, %v866
        %v923 = vsub.f32 1.0, %v881
        %v924 = vsub.f32 1.0, %v896
        %v925 = vsub.f32 1.0, %v911
        %v926 = vsel %vm912, %v821, %v919
        %v927 = vsel %vm913, %v836, %v920
        %v928 = vsel %vm914, %v851, %v921
        %v929 = vsel %vm915, %v866, %v922
        %v930 = vsel %vm916, %v881, %v923
        %v931 = vsel %vm917, %v896, %v924
        %v932 = vsel %vm918, %v911, %v925
        %v933 = vadd.f32 %v719, %v926
        %v934 = vadd.f32 %v720, %v927
        %v935 = vadd.f32 %v721, %v928
        %v936 = vadd.f32 %v722, %v929
        %v937 = vadd.f32 %v723, %v930
        %v938 = vadd.f32 %v724, %v931
        %v939 = vadd.f32 %v725, %v932
        %s940 = scalar_lea.vmem %s264, 168 [#allocation2]
        %v941 = vld [vmem:[%s940] sm:$0xff]
        %v942 = vld [vmem:[%s940 + $0x8] sm:$0xff]
        %v943 = vld [vmem:[%s940 + $0x10] sm:$0xff]
        %v944 = vld [vmem:[%s940 + $0x18] sm:$0xff]
        %v945 = vld [vmem:[%s940 + $0x20] sm:$0xff]
        %v946 = vld [vmem:[%s940 + $0x28] sm:$0xff]
        %v947 = vld [vmem:[%s940 + $0x30] sm:$0xff]
        %948 = vmatpush.msra.mxu0 %v305
        %949 = vmatpush.msra.mxu0 %v304
        %950 = vmatpush.msra.mxu0 %v303
        %951 = vmatpush.msra.mxu0 %v302
        %952 = vmatpush.msra.mxu0 %v301
        %953 = vmatpush.msra.mxu0 %v300
        %954 = vmatpush.msra.mxu0 %v299
        %955 = vmatpush.msra.mxu0 %v298
        %956 = vmatpush.msra.mxu0 %v297
        %957 = vmatpush.msra.mxu0 %v296
        %958 = vmatpush.msra.mxu0 %v295
        %959 = vmatpush.msra.mxu0 %v294
        %960 = vmatpush.msra.mxu0 %v293
        %961 = vmatpush.msra.mxu0 %v292
        %962 = vmatpush.msra.mxu0 %v291
        %963 = vmatpush.msra.mxu0 %v290
        %964 = vmatmul.f32.gmra.mxu0 %v941
        %v965 = vpop.f32.mrf.mxu0
        %v966 = vadd.f32 0.0, %v965
        %967 = vmatmul.f32.gmra.mxu0 %v942
        %v968 = vpop.f32.mrf.mxu0
        %v969 = vadd.f32 0.0, %v968
        %970 = vmatmul.f32.gmra.mxu0 %v943
        %v971 = vpop.f32.mrf.mxu0
        %v972 = vadd.f32 0.0, %v971
        %973 = vmatmul.f32.gmra.mxu0 %v944
        %v974 = vpop.f32.mrf.mxu0
        %v975 = vadd.f32 0.0, %v974
        %976 = vmatmul.f32.gmra.mxu0 %v945
        %v977 = vpop.f32.mrf.mxu0
        %v978 = vadd.f32 0.0, %v977
        %979 = vmatmul.f32.gmra.mxu0 %v946
        %v980 = vpop.f32.mrf.mxu0
        %v981 = vadd.f32 0.0, %v980
        %982 = vmatmul.f32.gmra.mxu0 %v947
        %v983 = vpop.f32.mrf.mxu0
        %v984 = vadd.f32 0.0, %v983
        %985 = vdwg.mxu0
        %v986 = vand.u32 2147483647, %v966
        %v987 = vand.u32 2147483647, %v969
        %v988 = vand.u32 2147483647, %v972
        %v989 = vand.u32 2147483647, %v975
        %v990 = vand.u32 2147483647, %v978
        %v991 = vand.u32 2147483647, %v981
        %v992 = vand.u32 2147483647, %v984
        %v993 = vsub.f32 0.0, %v986
        %v994 = vsub.f32 0.0, %v987
        %v995 = vsub.f32 0.0, %v988
        %v996 = vsub.f32 0.0, %v989
        %v997 = vsub.f32 0.0, %v990
        %v998 = vsub.f32 0.0, %v991
        %v999 = vsub.f32 0.0, %v992
        %v1000 = vmul.f32 %v993, 1.442695
        %v1001 = vpow.pop %v1000
        %v1002 = vmul.f32 %v994, 1.442695
        %v1003 = vpow.pop %v1002
        %v1004 = vmul.f32 %v995, 1.442695
        %v1005 = vpow.pop %v1004
        %v1006 = vmul.f32 %v996, 1.442695
        %v1007 = vpow.pop %v1006
        %v1008 = vmul.f32 %v997, 1.442695
        %v1009 = vpow.pop %v1008
        %v1010 = vmul.f32 %v998, 1.442695
        %v1011 = vpow.pop %v1010
        %v1012 = vmul.f32 %v999, 1.442695
        %v1013 = vpow.pop %v1012
        %v1014 = vadd.f32 %v1001, 1.0
        %v1015 = vadd.f32 %v1003, 1.0
        %v1016 = vadd.f32 %v1005, 1.0
        %v1017 = vadd.f32 %v1007, 1.0
        %v1018 = vadd.f32 %v1009, 1.0
        %v1019 = vadd.f32 %v1011, 1.0
        %v1020 = vadd.f32 %v1013, 1.0
        %v1021 = vrcp.pop %v1014
        %v1022 = vmul.f32 %v1014, %v1021
        %v1023 = vsub.f32 1.0, %v1022
        %v1024 = vmul.f32 %v1021, %v1023
        %v1025 = vadd.f32 %v1021, %v1024
        %vm1026 = vweird.f32 %v1014
        %vm1027 = vweird.f32 %v1021
        %vm1028 = vmor %vm1026, %vm1027
        %v1029 = vsel %vm1028, %v1021, %v1025
        %v1030 = vand.u32 2147483647, %v1014
        %vm1031 = vcmp.eq.f32.partialorder %v1030, 8.507059e+37
        %v1032 = vand.u32 %v1014, 2147483648
        %v1033 = vor.u32 1.1754944e-38, %v1032
        %v1034 = vsel %vm1031, %v1033, %v1029
        %v1035 = vmul.f32 1.0, %v1034
        %v1036 = vrcp.pop %v1015
        %v1037 = vmul.f32 %v1015, %v1036
        %v1038 = vsub.f32 1.0, %v1037
        %v1039 = vmul.f32 %v1036, %v1038
        %v1040 = vadd.f32 %v1036, %v1039
        %vm1041 = vweird.f32 %v1015
        %vm1042 = vweird.f32 %v1036
        %vm1043 = vmor %vm1041, %vm1042
        %v1044 = vsel %vm1043, %v1036, %v1040
        %v1045 = vand.u32 2147483647, %v1015
        %vm1046 = vcmp.eq.f32.partialorder %v1045, 8.507059e+37
        %v1047 = vand.u32 %v1015, 2147483648
        %v1048 = vor.u32 1.1754944e-38, %v1047
        %v1049 = vsel %vm1046, %v1048, %v1044
        %v1050 = vmul.f32 1.0, %v1049
        %v1051 = vrcp.pop %v1016
        %v1052 = vmul.f32 %v1016, %v1051
        %v1053 = vsub.f32 1.0, %v1052
        %v1054 = vmul.f32 %v1051, %v1053
        %v1055 = vadd.f32 %v1051, %v1054
        %vm1056 = vweird.f32 %v1016
        %vm1057 = vweird.f32 %v1051
        %vm1058 = vmor %vm1056, %vm1057
        %v1059 = vsel %vm1058, %v1051, %v1055
        %v1060 = vand.u32 2147483647, %v1016
        %vm1061 = vcmp.eq.f32.partialorder %v1060, 8.507059e+37
        %v1062 = vand.u32 %v1016, 2147483648
        %v1063 = vor.u32 1.1754944e-38, %v1062
        %v1064 = vsel %vm1061, %v1063, %v1059
        %v1065 = vmul.f32 1.0, %v1064
        %v1066 = vrcp.pop %v1017
        %v1067 = vmul.f32 %v1017, %v1066
        %v1068 = vsub.f32 1.0, %v1067
        %v1069 = vmul.f32 %v1066, %v1068
        %v1070 = vadd.f32 %v1066, %v1069
        %vm1071 = vweird.f32 %v1017
        %vm1072 = vweird.f32 %v1066
        %vm1073 = vmor %vm1071, %vm1072
        %v1074 = vsel %vm1073, %v1066, %v1070
        %v1075 = vand.u32 2147483647, %v1017
        %vm1076 = vcmp.eq.f32.partialorder %v1075, 8.507059e+37
        %v1077 = vand.u32 %v1017, 2147483648
        %v1078 = vor.u32 1.1754944e-38, %v1077
        %v1079 = vsel %vm1076, %v1078, %v1074
        %v1080 = vmul.f32 1.0, %v1079
        %v1081 = vrcp.pop %v1018
        %v1082 = vmul.f32 %v1018, %v1081
        %v1083 = vsub.f32 1.0, %v1082
        %v1084 = vmul.f32 %v1081, %v1083
        %v1085 = vadd.f32 %v1081, %v1084
        %vm1086 = vweird.f32 %v1018
        %vm1087 = vweird.f32 %v1081
        %vm1088 = vmor %vm1086, %vm1087
        %v1089 = vsel %vm1088, %v1081, %v1085
        %v1090 = vand.u32 2147483647, %v1018
        %vm1091 = vcmp.eq.f32.partialorder %v1090, 8.507059e+37
        %v1092 = vand.u32 %v1018, 2147483648
        %v1093 = vor.u32 1.1754944e-38, %v1092
        %v1094 = vsel %vm1091, %v1093, %v1089
        %v1095 = vmul.f32 1.0, %v1094
        %v1096 = vrcp.pop %v1019
        %v1097 = vmul.f32 %v1019, %v1096
        %v1098 = vsub.f32 1.0, %v1097
        %v1099 = vmul.f32 %v1096, %v1098
        %v1100 = vadd.f32 %v1096, %v1099
        %vm1101 = vweird.f32 %v1019
        %vm1102 = vweird.f32 %v1096
        %vm1103 = vmor %vm1101, %vm1102
        %v1104 = vsel %vm1103, %v1096, %v1100
        %v1105 = vand.u32 2147483647, %v1019
        %vm1106 = vcmp.eq.f32.partialorder %v1105, 8.507059e+37
        %v1107 = vand.u32 %v1019, 2147483648
        %v1108 = vor.u32 1.1754944e-38, %v1107
        %v1109 = vsel %vm1106, %v1108, %v1104
        %v1110 = vmul.f32 1.0, %v1109
        %v1111 = vrcp.pop %v1020
        %v1112 = vmul.f32 %v1020, %v1111
        %v1113 = vsub.f32 1.0, %v1112
        %v1114 = vmul.f32 %v1111, %v1113
        %v1115 = vadd.f32 %v1111, %v1114
        %vm1116 = vweird.f32 %v1020
        %vm1117 = vweird.f32 %v1111
        %vm1118 = vmor %vm1116, %vm1117
        %v1119 = vsel %vm1118, %v1111, %v1115
        %v1120 = vand.u32 2147483647, %v1020
        %vm1121 = vcmp.eq.f32.partialorder %v1120, 8.507059e+37
        %v1122 = vand.u32 %v1020, 2147483648
        %v1123 = vor.u32 1.1754944e-38, %v1122
        %v1124 = vsel %vm1121, %v1123, %v1119
        %v1125 = vmul.f32 1.0, %v1124
        %vm1126 = vcmp.ge.f32.partialorder %v966, 0.0
        %vm1127 = vcmp.ge.f32.partialorder %v969, 0.0
        %vm1128 = vcmp.ge.f32.partialorder %v972, 0.0
        %vm1129 = vcmp.ge.f32.partialorder %v975, 0.0
        %vm1130 = vcmp.ge.f32.partialorder %v978, 0.0
        %vm1131 = vcmp.ge.f32.partialorder %v981, 0.0
        %vm1132 = vcmp.ge.f32.partialorder %v984, 0.0
        %v1133 = vsub.f32 1.0, %v1035
        %v1134 = vsub.f32 1.0, %v1050
        %v1135 = vsub.f32 1.0, %v1065
        %v1136 = vsub.f32 1.0, %v1080
        %v1137 = vsub.f32 1.0, %v1095
        %v1138 = vsub.f32 1.0, %v1110
        %v1139 = vsub.f32 1.0, %v1125
        %v1140 = vsel %vm1126, %v1035, %v1133
        %v1141 = vsel %vm1127, %v1050, %v1134
        %v1142 = vsel %vm1128, %v1065, %v1135
        %v1143 = vsel %vm1129, %v1080, %v1136
        %v1144 = vsel %vm1130, %v1095, %v1137
        %v1145 = vsel %vm1131, %v1110, %v1138
        %v1146 = vsel %vm1132, %v1125, %v1139
        %v1147 = vadd.f32 %v933, %v1140
        %v1148 = vadd.f32 %v934, %v1141
        %v1149 = vadd.f32 %v935, %v1142
        %v1150 = vadd.f32 %v936, %v1143
        %v1151 = vadd.f32 %v937, %v1144
        %v1152 = vadd.f32 %v938, %v1145
        %v1153 = vadd.f32 %v939, %v1146
        %v1154 = vmul.f32 %v1147, 0.25
        %v1155 = vmul.f32 %v1148, 0.25
        %v1156 = vmul.f32 %v1149, 0.25
        %v1157 = vmul.f32 %v1150, 0.25
        %v1158 = vmul.f32 %v1151, 0.25
        %v1159 = vmul.f32 %v1152, 0.25
        %v1160 = vmul.f32 %v1153, 0.25
        %1161 = vst [vmem:[%s288] sm:$0xff] %v1154
        %1162 = vst [vmem:[%s288 + $0x8] sm:$0xff] %v1155
        %1163 = vst [vmem:[%s288 + $0x10] sm:$0xff] %v1156
        %1164 = vst [vmem:[%s288 + $0x18] sm:$0xff] %v1157
        %1165 = vst [vmem:[%s288 + $0x20] sm:$0xff] %v1158
        %1166 = vst [vmem:[%s288 + $0x28] sm:$0xff] %v1159
        %1167 = vst [vmem:[%s288 + $0x30] sm:$0xff] %v1160
        %s1168 = smul.u32 7, %s13
        %p1169 = scmp.lt.s32.totalorder %s1168, 48
        %s1170 = scalar_select %p1169, %s1168, 48
        %s1171 = smul.addr %s1170, 8
        %s1172 = scalar_lea.vmem %s2, %s1171
        // Predicated region
        $region67: #{lenet_loss_pallas.3} parent=61 // pred_check
          %p1173 = pneg %p78
        $region68: #{lenet_loss_pallas.3} parent=61 // pred_check_branch
          %1175 = sbr.rel (%p1173) target = $region70
        $region69: #{lenet_loss_pallas.3} parent=61 // pred_region
          %s1176 = smul.u32 7, %s13
        $region70: #{lenet_loss_pallas.3} parent=61 // pred_fallthru
          _
      $region62: #{lenet_loss_pallas.3} parent=5 // pred_fallthru
        _
      %p1177 = scmp.le.s32.totalorder 2, %s8
      // Predicated region
      $region71: #{lenet_loss_pallas.3} parent=5 // pred_check
        %p1178 = pneg %p1177
      $region72: #{lenet_loss_pallas.3} parent=5 // pred_check_branch
        %1180 = sbr.rel (%p1178) target = $region74
      $region73: #{lenet_loss_pallas.3} parent=5 // pred_region
        %s1181 = ssub.s32 %s8, 2
        // Predicated region
        $region75: #{lenet_loss_pallas.3} parent=73 // pred_check
          %p1182 = pneg %p84
        $region76: #{lenet_loss_pallas.3} parent=73 // pred_check_branch
          %1184 = sbr.rel (%p1182) target = $region78
        $region77: #{lenet_loss_pallas.3} parent=73 // pred_region
          %s1185 = smul.u32 7, %s14
          %p1186 = scmp.lt.s32.totalorder %s1185, 48
          %s1187 = scalar_select %p1186, %s1185, 48
          %s1188 = smul.addr %s1187, 8
          %s1189 = scalar_lea.vmem %s2, %s1188
        $region78: #{lenet_loss_pallas.3} parent=73 // pred_fallthru
          _
      $region74: #{lenet_loss_pallas.3} parent=5 // pred_fallthru
        _
    $region6: #{lenet_loss_pallas.3} parent=1 // loop_footer
      %s12 = sadd.s32 1, %s8
    $region7: #{lenet_loss_pallas.3} parent=1 // loop_footer_branch
      %7 = sbr.rel target = $region3
    $region8: #{lenet_loss_pallas.3} parent=1 // loop_exit
      _

// kernel: lenet_loss_pallas.4
$region0: #{lenet_loss_pallas.4}
  #allocation0 [shape = 'u32[]', space=smem, size = 0x4, offset = 0x4, fixed_abs, tag = 'smem constant byte address 0x4 - core index']
  #allocation1 [shape = 'u32[72,128]{1,0:T(1,128)}', space=vmem, size = 0x9000, scoped, tag = 'internal scratch']
  %s0 = inlined_call_operand.vmem [shape: f32[4,56,256], index: 0, kind: input, shape index: {}]
  %s1 = inlined_call_operand.vmem [shape: f32[256,128], index: 1, kind: input, shape index: {}]
  %s2 = inlined_call_operand.vmem [shape: f32[56,128], index: 2, kind: output, shape index: {}]
  %s3 = sld [smem:[#allocation0]]
  $region18: #{lenet_loss_pallas.4} parent=0
    _
  %s5 = ssub.s32 1, %s3
  %s6 = scalar_select 0, %s5, %s3
  // Predicated region
  $region2: #{lenet_loss_pallas.4} parent=0 // pred_check
    _
  $region3: #{lenet_loss_pallas.4} parent=0 // pred_check_branch
    %8 = sbr.rel (0) target = $region5
  $region4: #{lenet_loss_pallas.4} parent=0 // pred_region
    _
  $region5: #{lenet_loss_pallas.4} parent=0 // pred_fallthru
    _
  // Predicated region
  $region6: #{lenet_loss_pallas.4} parent=0 // pred_check
    _
  $region7: #{lenet_loss_pallas.4} parent=0 // pred_check_branch
    %10 = sbr.rel (0) target = $region9
  $region8: #{lenet_loss_pallas.4} parent=0 // pred_region
    _
  $region9: #{lenet_loss_pallas.4} parent=0 // pred_fallthru
    _
  %v11 = vld [vmem:[%s1] sm:$0xff]
  %v12 = vld [vmem:[%s1 + $0x8] sm:$0xff]
  %v13 = vld [vmem:[%s1 + $0x10] sm:$0xff]
  %v14 = vld [vmem:[%s1 + $0x18] sm:$0xff]
  %v15 = vld [vmem:[%s1 + $0x20] sm:$0xff]
  %v16 = vld [vmem:[%s1 + $0x28] sm:$0xff]
  %v17 = vld [vmem:[%s1 + $0x30] sm:$0xff]
  %v18 = vld [vmem:[%s1 + $0x38] sm:$0xff]
  %v19 = vld [vmem:[%s1 + $0x40] sm:$0xff]
  %v20 = vld [vmem:[%s1 + $0x48] sm:$0xff]
  %v21 = vld [vmem:[%s1 + $0x50] sm:$0xff]
  %v22 = vld [vmem:[%s1 + $0x58] sm:$0xff]
  %v23 = vld [vmem:[%s1 + $0x60] sm:$0xff]
  %v24 = vld [vmem:[%s1 + $0x68] sm:$0xff]
  %v25 = vld [vmem:[%s1 + $0x70] sm:$0xff]
  %v26 = vld [vmem:[%s1 + $0x78] sm:$0xff]
  %v27 = vld [vmem:[%s1 + $0x80] sm:$0xff]
  %v28 = vld [vmem:[%s1 + $0x88] sm:$0xff]
  %v29 = vld [vmem:[%s1 + $0x90] sm:$0xff]
  %v30 = vld [vmem:[%s1 + $0x98] sm:$0xff]
  %v31 = vld [vmem:[%s1 + $0xa0] sm:$0xff]
  %v32 = vld [vmem:[%s1 + $0xa8] sm:$0xff]
  %v33 = vld [vmem:[%s1 + $0xb0] sm:$0xff]
  %v34 = vld [vmem:[%s1 + $0xb8] sm:$0xff]
  %v35 = vld [vmem:[%s1 + $0xc0] sm:$0xff]
  %v36 = vld [vmem:[%s1 + $0xc8] sm:$0xff]
  %v37 = vld [vmem:[%s1 + $0xd0] sm:$0xff]
  %v38 = vld [vmem:[%s1 + $0xd8] sm:$0xff]
  %v39 = vld [vmem:[%s1 + $0xe0] sm:$0xff]
  %v40 = vld [vmem:[%s1 + $0xe8] sm:$0xff]
  %v41 = vld [vmem:[%s1 + $0xf0] sm:$0xff]
  %v42 = vld [vmem:[%s1 + $0xf8] sm:$0xff]
  %v43 = vld [vmem:[%s0] sm:$0xff]
  %v44 = vld [vmem:[%s0 + $0x8] sm:$0xff]
  %v45 = vld [vmem:[%s0 + $0x10] sm:$0xff]
  %v46 = vld [vmem:[%s0 + $0x18] sm:$0xff]
  %v47 = vld [vmem:[%s0 + $0x20] sm:$0xff]
  %v48 = vld [vmem:[%s0 + $0x28] sm:$0xff]
  %v49 = vld [vmem:[%s0 + $0x30] sm:$0xff]
  %v50 = vld [vmem:[%s0 + $0x38] sm:$0xff]
  %v51 = vld [vmem:[%s0 + $0x40] sm:$0xff]
  %v52 = vld [vmem:[%s0 + $0x48] sm:$0xff]
  %v53 = vld [vmem:[%s0 + $0x50] sm:$0xff]
  %v54 = vld [vmem:[%s0 + $0x58] sm:$0xff]
  %v55 = vld [vmem:[%s0 + $0x60] sm:$0xff]
  %v56 = vld [vmem:[%s0 + $0x68] sm:$0xff]
  %57 = vmatpush.msra.mxu0 %v26
  %58 = vmatpush.msra.mxu0 %v25
  %59 = vmatpush.msra.mxu0 %v24
  %60 = vmatpush.msra.mxu0 %v23
  %61 = vmatpush.msra.mxu0 %v22
  %62 = vmatpush.msra.mxu0 %v21
  %63 = vmatpush.msra.mxu0 %v20
  %64 = vmatpush.msra.mxu0 %v19
  %65 = vmatpush.msra.mxu0 %v18
  %66 = vmatpush.msra.mxu0 %v17
  %67 = vmatpush.msra.mxu0 %v16
  %68 = vmatpush.msra.mxu0 %v15
  %69 = vmatpush.msra.mxu0 %v14
  %70 = vmatpush.msra.mxu0 %v13
  %71 = vmatpush.msra.mxu0 %v12
  %72 = vmatpush.msra.mxu0 %v11
  %73 = vmatmul.f32.gmra.mxu0 %v43
  %v74 = vpop.f32.mrf.mxu0
  %v75 = vadd.f32 0.0, %v74
  %76 = vmatmul.f32.gmra.mxu0 %v45
  %v77 = vpop.f32.mrf.mxu0
  %v78 = vadd.f32 0.0, %v77
  %79 = vmatmul.f32.gmra.mxu0 %v47
  %v80 = vpop.f32.mrf.mxu0
  %v81 = vadd.f32 0.0, %v80
  %82 = vmatmul.f32.gmra.mxu0 %v49
  %v83 = vpop.f32.mrf.mxu0
  %v84 = vadd.f32 0.0, %v83
  %85 = vmatmul.f32.gmra.mxu0 %v51
  %v86 = vpop.f32.mrf.mxu0
  %v87 = vadd.f32 0.0, %v86
  %88 = vmatmul.f32.gmra.mxu0 %v53
  %v89 = vpop.f32.mrf.mxu0
  %v90 = vadd.f32 0.0, %v89
  %91 = vmatmul.f32.gmra.mxu0 %v55
  %v92 = vpop.f32.mrf.mxu0
  %v93 = vadd.f32 0.0, %v92
  %94 = vdwg.mxu0
  %95 = vmatpush.msra.mxu0 %v42
  %96 = vmatpush.msra.mxu0 %v41
  %97 = vmatpush.msra.mxu0 %v40
  %98 = vmatpush.msra.mxu0 %v39
  %99 = vmatpush.msra.mxu0 %v38
  %100 = vmatpush.msra.mxu0 %v37
  %101 = vmatpush.msra.mxu0 %v36
  %102 = vmatpush.msra.mxu0 %v35
  %103 = vmatpush.msra.mxu0 %v34
  %104 = vmatpush.msra.mxu0 %v33
  %105 = vmatpush.msra.mxu0 %v32
  %106 = vmatpush.msra.mxu0 %v31
  %107 = vmatpush.msra.mxu0 %v30
  %108 = vmatpush.msra.mxu0 %v29
  %109 = vmatpush.msra.mxu0 %v28
  %110 = vmatpush.msra.mxu0 %v27
  %111 = vmatmul.f32.gmra.mxu0 %v44
  %v112 = vpop.f32.mrf.mxu0
  %v113 = vadd.f32 %v75, %v112
  %114 = vmatmul.f32.gmra.mxu0 %v46
  %v115 = vpop.f32.mrf.mxu0
  %v116 = vadd.f32 %v78, %v115
  %117 = vmatmul.f32.gmra.mxu0 %v48
  %v118 = vpop.f32.mrf.mxu0
  %v119 = vadd.f32 %v81, %v118
  %120 = vmatmul.f32.gmra.mxu0 %v50
  %v121 = vpop.f32.mrf.mxu0
  %v122 = vadd.f32 %v84, %v121
  %123 = vmatmul.f32.gmra.mxu0 %v52
  %v124 = vpop.f32.mrf.mxu0
  %v125 = vadd.f32 %v87, %v124
  %126 = vmatmul.f32.gmra.mxu0 %v54
  %v127 = vpop.f32.mrf.mxu0
  %v128 = vadd.f32 %v90, %v127
  %129 = vmatmul.f32.gmra.mxu0 %v56
  %v130 = vpop.f32.mrf.mxu0
  %v131 = vadd.f32 %v93, %v130
  %132 = vdwg.mxu0
  %v133 = vand.u32 2147483647, %v113
  %v134 = vand.u32 2147483647, %v116
  %v135 = vand.u32 2147483647, %v119
  %v136 = vand.u32 2147483647, %v122
  %v137 = vand.u32 2147483647, %v125
  %v138 = vand.u32 2147483647, %v128
  %v139 = vand.u32 2147483647, %v131
  %v140 = vsub.f32 0.0, %v133
  %v141 = vsub.f32 0.0, %v134
  %v142 = vsub.f32 0.0, %v135
  %v143 = vsub.f32 0.0, %v136
  %v144 = vsub.f32 0.0, %v137
  %v145 = vsub.f32 0.0, %v138
  %v146 = vsub.f32 0.0, %v139
  %v147 = vmul.f32 %v140, 1.442695
  %v148 = vpow.pop %v147
  %v149 = vmul.f32 %v141, 1.442695
  %v150 = vpow.pop %v149
  %v151 = vmul.f32 %v142, 1.442695
  %v152 = vpow.pop %v151
  %v153 = vmul.f32 %v143, 1.442695
  %v154 = vpow.pop %v153
  %v155 = vmul.f32 %v144, 1.442695
  %v156 = vpow.pop %v155
  %v157 = vmul.f32 %v145, 1.442695
  %v158 = vpow.pop %v157
  %v159 = vmul.f32 %v146, 1.442695
  %v160 = vpow.pop %v159
  %v161 = vadd.f32 %v148, 1.0
  %v162 = vadd.f32 %v150, 1.0
  %v163 = vadd.f32 %v152, 1.0
  %v164 = vadd.f32 %v154, 1.0
  %v165 = vadd.f32 %v156, 1.0
  %v166 = vadd.f32 %v158, 1.0
  %v167 = vadd.f32 %v160, 1.0
  %v168 = vrcp.pop %v161
  %v169 = vmul.f32 %v161, %v168
  %v170 = vsub.f32 1.0, %v169
  %v171 = vmul.f32 %v168, %v170
  %v172 = vadd.f32 %v168, %v171
  %vm173 = vweird.f32 %v161
  %vm174 = vweird.f32 %v168
  %vm175 = vmor %vm173, %vm174
  %v176 = vsel %vm175, %v168, %v172
  %v177 = vand.u32 2147483647, %v161
  %vm178 = vcmp.eq.f32.partialorder %v177, 8.507059e+37
  %v179 = vand.u32 %v161, 2147483648
  %v180 = vor.u32 1.1754944e-38, %v179
  %v181 = vsel %vm178, %v180, %v176
  %v182 = vmul.f32 1.0, %v181
  %v183 = vrcp.pop %v162
  %v184 = vmul.f32 %v162, %v183
  %v185 = vsub.f32 1.0, %v184
  %v186 = vmul.f32 %v183, %v185
  %v187 = vadd.f32 %v183, %v186
  %vm188 = vweird.f32 %v162
  %vm189 = vweird.f32 %v183
  %vm190 = vmor %vm188, %vm189
  %v191 = vsel %vm190, %v183, %v187
  %v192 = vand.u32 2147483647, %v162
  %vm193 = vcmp.eq.f32.partialorder %v192, 8.507059e+37
  %v194 = vand.u32 %v162, 2147483648
  %v195 = vor.u32 1.1754944e-38, %v194
  %v196 = vsel %vm193, %v195, %v191
  %v197 = vmul.f32 1.0, %v196
  %v198 = vrcp.pop %v163
  %v199 = vmul.f32 %v163, %v198
  %v200 = vsub.f32 1.0, %v199
  %v201 = vmul.f32 %v198, %v200
  %v202 = vadd.f32 %v198, %v201
  %vm203 = vweird.f32 %v163
  %vm204 = vweird.f32 %v198
  %vm205 = vmor %vm203, %vm204
  %v206 = vsel %vm205, %v198, %v202
  %v207 = vand.u32 2147483647, %v163
  %vm208 = vcmp.eq.f32.partialorder %v207, 8.507059e+37
  %v209 = vand.u32 %v163, 2147483648
  %v210 = vor.u32 1.1754944e-38, %v209
  %v211 = vsel %vm208, %v210, %v206
  %v212 = vmul.f32 1.0, %v211
  %v213 = vrcp.pop %v164
  %v214 = vmul.f32 %v164, %v213
  %v215 = vsub.f32 1.0, %v214
  %v216 = vmul.f32 %v213, %v215
  %v217 = vadd.f32 %v213, %v216
  %vm218 = vweird.f32 %v164
  %vm219 = vweird.f32 %v213
  %vm220 = vmor %vm218, %vm219
  %v221 = vsel %vm220, %v213, %v217
  %v222 = vand.u32 2147483647, %v164
  %vm223 = vcmp.eq.f32.partialorder %v222, 8.507059e+37
  %v224 = vand.u32 %v164, 2147483648
  %v225 = vor.u32 1.1754944e-38, %v224
  %v226 = vsel %vm223, %v225, %v221
  %v227 = vmul.f32 1.0, %v226
  %v228 = vrcp.pop %v165
  %v229 = vmul.f32 %v165, %v228
  %v230 = vsub.f32 1.0, %v229
  %v231 = vmul.f32 %v228, %v230
  %v232 = vadd.f32 %v228, %v231
  %vm233 = vweird.f32 %v165
  %vm234 = vweird.f32 %v228
  %vm235 = vmor %vm233, %vm234
  %v236 = vsel %vm235, %v228, %v232
  %v237 = vand.u32 2147483647, %v165
  %vm238 = vcmp.eq.f32.partialorder %v237, 8.507059e+37
  %v239 = vand.u32 %v165, 2147483648
  %v240 = vor.u32 1.1754944e-38, %v239
  %v241 = vsel %vm238, %v240, %v236
  %v242 = vmul.f32 1.0, %v241
  %v243 = vrcp.pop %v166
  %v244 = vmul.f32 %v166, %v243
  %v245 = vsub.f32 1.0, %v244
  %v246 = vmul.f32 %v243, %v245
  %v247 = vadd.f32 %v243, %v246
  %vm248 = vweird.f32 %v166
  %vm249 = vweird.f32 %v243
  %vm250 = vmor %vm248, %vm249
  %v251 = vsel %vm250, %v243, %v247
  %v252 = vand.u32 2147483647, %v166
  %vm253 = vcmp.eq.f32.partialorder %v252, 8.507059e+37
  %v254 = vand.u32 %v166, 2147483648
  %v255 = vor.u32 1.1754944e-38, %v254
  %v256 = vsel %vm253, %v255, %v251
  %v257 = vmul.f32 1.0, %v256
  %v258 = vrcp.pop %v167
  %v259 = vmul.f32 %v167, %v258
  %v260 = vsub.f32 1.0, %v259
  %v261 = vmul.f32 %v258, %v260
  %v262 = vadd.f32 %v258, %v261
  %vm263 = vweird.f32 %v167
  %vm264 = vweird.f32 %v258
  %vm265 = vmor %vm263, %vm264
  %v266 = vsel %vm265, %v258, %v262
  %v267 = vand.u32 2147483647, %v167
  %vm268 = vcmp.eq.f32.partialorder %v267, 8.507059e+37
  %v269 = vand.u32 %v167, 2147483648
  %v270 = vor.u32 1.1754944e-38, %v269
  %v271 = vsel %vm268, %v270, %v266
  %v272 = vmul.f32 1.0, %v271
  %vm273 = vcmp.ge.f32.partialorder %v113, 0.0
  %vm274 = vcmp.ge.f32.partialorder %v116, 0.0
  %vm275 = vcmp.ge.f32.partialorder %v119, 0.0
  %vm276 = vcmp.ge.f32.partialorder %v122, 0.0
  %vm277 = vcmp.ge.f32.partialorder %v125, 0.0
  %vm278 = vcmp.ge.f32.partialorder %v128, 0.0
  %vm279 = vcmp.ge.f32.partialorder %v131, 0.0
  %v280 = vsub.f32 1.0, %v182
  %v281 = vsub.f32 1.0, %v197
  %v282 = vsub.f32 1.0, %v212
  %v283 = vsub.f32 1.0, %v227
  %v284 = vsub.f32 1.0, %v242
  %v285 = vsub.f32 1.0, %v257
  %v286 = vsub.f32 1.0, %v272
  %v287 = vsel %vm273, %v182, %v280
  %v288 = vsel %vm274, %v197, %v281
  %v289 = vsel %vm275, %v212, %v282
  %v290 = vsel %vm276, %v227, %v283
  %v291 = vsel %vm277, %v242, %v284
  %v292 = vsel %vm278, %v257, %v285
  %v293 = vsel %vm279, %v272, %v286
  %s294 = scalar_lea.vmem %s0, 112
  %v295 = vld [vmem:[%s294] sm:$0xff]
  %v296 = vld [vmem:[%s294 + $0x8] sm:$0xff]
  %v297 = vld [vmem:[%s294 + $0x10] sm:$0xff]
  %v298 = vld [vmem:[%s294 + $0x18] sm:$0xff]
  %v299 = vld [vmem:[%s294 + $0x20] sm:$0xff]
  %v300 = vld [vmem:[%s294 + $0x28] sm:$0xff]
  %v301 = vld [vmem:[%s294 + $0x30] sm:$0xff]
  %v302 = vld [vmem:[%s294 + $0x38] sm:$0xff]
  %v303 = vld [vmem:[%s294 + $0x40] sm:$0xff]
  %v304 = vld [vmem:[%s294 + $0x48] sm:$0xff]
  %v305 = vld [vmem:[%s294 + $0x50] sm:$0xff]
  %v306 = vld [vmem:[%s294 + $0x58] sm:$0xff]
  %v307 = vld [vmem:[%s294 + $0x60] sm:$0xff]
  %v308 = vld [vmem:[%s294 + $0x68] sm:$0xff]
  %309 = vmatpush.msra.mxu0 %v26
  %310 = vmatpush.msra.mxu0 %v25
  %311 = vmatpush.msra.mxu0 %v24
  %312 = vmatpush.msra.mxu0 %v23
  %313 = vmatpush.msra.mxu0 %v22
  %314 = vmatpush.msra.mxu0 %v21
  %315 = vmatpush.msra.mxu0 %v20
  %316 = vmatpush.msra.mxu0 %v19
  %317 = vmatpush.msra.mxu0 %v18
  %318 = vmatpush.msra.mxu0 %v17
  %319 = vmatpush.msra.mxu0 %v16
  %320 = vmatpush.msra.mxu0 %v15
  %321 = vmatpush.msra.mxu0 %v14
  %322 = vmatpush.msra.mxu0 %v13
  %323 = vmatpush.msra.mxu0 %v12
  %324 = vmatpush.msra.mxu0 %v11
  %325 = vmatmul.f32.gmra.mxu0 %v295
  %v326 = vpop.f32.mrf.mxu0
  %v327 = vadd.f32 0.0, %v326
  %328 = vmatmul.f32.gmra.mxu0 %v297
  %v329 = vpop.f32.mrf.mxu0
  %v330 = vadd.f32 0.0, %v329
  %331 = vmatmul.f32.gmra.mxu0 %v299
  %v332 = vpop.f32.mrf.mxu0
  %v333 = vadd.f32 0.0, %v332
  %334 = vmatmul.f32.gmra.mxu0 %v301
  %v335 = vpop.f32.mrf.mxu0
  %v336 = vadd.f32 0.0, %v335
  %337 = vmatmul.f32.gmra.mxu0 %v303
  %v338 = vpop.f32.mrf.mxu0
  %v339 = vadd.f32 0.0, %v338
  %340 = vmatmul.f32.gmra.mxu0 %v305
  %v341 = vpop.f32.mrf.mxu0
  %v342 = vadd.f32 0.0, %v341
  %343 = vmatmul.f32.gmra.mxu0 %v307
  %v344 = vpop.f32.mrf.mxu0
  %v345 = vadd.f32 0.0, %v344
  %346 = vdwg.mxu0
  %347 = vmatpush.msra.mxu0 %v42
  %348 = vmatpush.msra.mxu0 %v41
  %349 = vmatpush.msra.mxu0 %v40
  %350 = vmatpush.msra.mxu0 %v39
  %351 = vmatpush.msra.mxu0 %v38
  %352 = vmatpush.msra.mxu0 %v37
  %353 = vmatpush.msra.mxu0 %v36
  %354 = vmatpush.msra.mxu0 %v35
  %355 = vmatpush.msra.mxu0 %v34
  %356 = vmatpush.msra.mxu0 %v33
  %357 = vmatpush.msra.mxu0 %v32
  %358 = vmatpush.msra.mxu0 %v31
  %359 = vmatpush.msra.mxu0 %v30
  %360 = vmatpush.msra.mxu0 %v29
  %361 = vmatpush.msra.mxu0 %v28
  %362 = vmatpush.msra.mxu0 %v27
  %363 = vmatmul.f32.gmra.mxu0 %v296
  %v364 = vpop.f32.mrf.mxu0
  %v365 = vadd.f32 %v327, %v364
  %366 = vmatmul.f32.gmra.mxu0 %v298
  %v367 = vpop.f32.mrf.mxu0
  %v368 = vadd.f32 %v330, %v367
  %369 = vmatmul.f32.gmra.mxu0 %v300
  %v370 = vpop.f32.mrf.mxu0
  %v371 = vadd.f32 %v333, %v370
  %372 = vmatmul.f32.gmra.mxu0 %v302
  %v373 = vpop.f32.mrf.mxu0
  %v374 = vadd.f32 %v336, %v373
  %375 = vmatmul.f32.gmra.mxu0 %v304
  %v376 = vpop.f32.mrf.mxu0
  %v377 = vadd.f32 %v339, %v376
  %378 = vmatmul.f32.gmra.mxu0 %v306
  %v379 = vpop.f32.mrf.mxu0
  %v380 = vadd.f32 %v342, %v379
  %381 = vmatmul.f32.gmra.mxu0 %v308
  %v382 = vpop.f32.mrf.mxu0
  %v383 = vadd.f32 %v345, %v382
  %384 = vdwg.mxu0
  %v385 = vand.u32 2147483647, %v365
  %v386 = vand.u32 2147483647, %v368
  %v387 = vand.u32 2147483647, %v371
  %v388 = vand.u32 2147483647, %v374
  %v389 = vand.u32 2147483647, %v377
  %v390 = vand.u32 2147483647, %v380
  %v391 = vand.u32 2147483647, %v383
  %v392 = vsub.f32 0.0, %v385
  %v393 = vsub.f32 0.0, %v386
  %v394 = vsub.f32 0.0, %v387
  %v395 = vsub.f32 0.0, %v388
  %v396 = vsub.f32 0.0, %v389
  %v397 = vsub.f32 0.0, %v390
  %v398 = vsub.f32 0.0, %v391
  %v399 = vmul.f32 %v392, 1.442695
  %v400 = vpow.pop %v399
  %v401 = vmul.f32 %v393, 1.442695
  %v402 = vpow.pop %v401
  %v403 = vmul.f32 %v394, 1.442695
  %v404 = vpow.pop %v403
  %v405 = vmul.f32 %v395, 1.442695
  %v406 = vpow.pop %v405
  %v407 = vmul.f32 %v396, 1.442695
  %v408 = vpow.pop %v407
  %v409 = vmul.f32 %v397, 1.442695
  %v410 = vpow.pop %v409
  %v411 = vmul.f32 %v398, 1.442695
  %v412 = vpow.pop %v411
  %v413 = vadd.f32 %v400, 1.0
  %v414 = vadd.f32 %v402, 1.0
  %v415 = vadd.f32 %v404, 1.0
  %v416 = vadd.f32 %v406, 1.0
  %v417 = vadd.f32 %v408, 1.0
  %v418 = vadd.f32 %v410, 1.0
  %v419 = vadd.f32 %v412, 1.0
  %v420 = vrcp.pop %v413
  %v421 = vmul.f32 %v413, %v420
  %v422 = vsub.f32 1.0, %v421
  %v423 = vmul.f32 %v420, %v422
  %v424 = vadd.f32 %v420, %v423
  %vm425 = vweird.f32 %v413
  %vm426 = vweird.f32 %v420
  %vm427 = vmor %vm425, %vm426
  %v428 = vsel %vm427, %v420, %v424
  %v429 = vand.u32 2147483647, %v413
  %vm430 = vcmp.eq.f32.partialorder %v429, 8.507059e+37
  %v431 = vand.u32 %v413, 2147483648
  %v432 = vor.u32 1.1754944e-38, %v431
  %v433 = vsel %vm430, %v432, %v428
  %v434 = vmul.f32 1.0, %v433
  %v435 = vrcp.pop %v414
  %v436 = vmul.f32 %v414, %v435
  %v437 = vsub.f32 1.0, %v436
  %v438 = vmul.f32 %v435, %v437
  %v439 = vadd.f32 %v435, %v438
  %vm440 = vweird.f32 %v414
  %vm441 = vweird.f32 %v435
  %vm442 = vmor %vm440, %vm441
  %v443 = vsel %vm442, %v435, %v439
  %v444 = vand.u32 2147483647, %v414
  %vm445 = vcmp.eq.f32.partialorder %v444, 8.507059e+37
  %v446 = vand.u32 %v414, 2147483648
  %v447 = vor.u32 1.1754944e-38, %v446
  %v448 = vsel %vm445, %v447, %v443
  %v449 = vmul.f32 1.0, %v448
  %v450 = vrcp.pop %v415
  %v451 = vmul.f32 %v415, %v450
  %v452 = vsub.f32 1.0, %v451
  %v453 = vmul.f32 %v450, %v452
  %v454 = vadd.f32 %v450, %v453
  %vm455 = vweird.f32 %v415
  %vm456 = vweird.f32 %v450
  %vm457 = vmor %vm455, %vm456
  %v458 = vsel %vm457, %v450, %v454
  %v459 = vand.u32 2147483647, %v415
  %vm460 = vcmp.eq.f32.partialorder %v459, 8.507059e+37
  %v461 = vand.u32 %v415, 2147483648
  %v462 = vor.u32 1.1754944e-38, %v461
  %v463 = vsel %vm460, %v462, %v458
  %v464 = vmul.f32 1.0, %v463
  %v465 = vrcp.pop %v416
  %v466 = vmul.f32 %v416, %v465
  %v467 = vsub.f32 1.0, %v466
  %v468 = vmul.f32 %v465, %v467
  %v469 = vadd.f32 %v465, %v468
  %vm470 = vweird.f32 %v416
  %vm471 = vweird.f32 %v465
  %vm472 = vmor %vm470, %vm471
  %v473 = vsel %vm472, %v465, %v469
  %v474 = vand.u32 2147483647, %v416
  %vm475 = vcmp.eq.f32.partialorder %v474, 8.507059e+37
  %v476 = vand.u32 %v416, 2147483648
  %v477 = vor.u32 1.1754944e-38, %v476
  %v478 = vsel %vm475, %v477, %v473
  %v479 = vmul.f32 1.0, %v478
  %v480 = vrcp.pop %v417
  %v481 = vmul.f32 %v417, %v480
  %v482 = vsub.f32 1.0, %v481
  %v483 = vmul.f32 %v480, %v482
  %v484 = vadd.f32 %v480, %v483
  %vm485 = vweird.f32 %v417
  %vm486 = vweird.f32 %v480
  %vm487 = vmor %vm485, %vm486
  %v488 = vsel %vm487, %v480, %v484
  %v489 = vand.u32 2147483647, %v417
  %vm490 = vcmp.eq.f32.partialorder %v489, 8.507059e+37
  %v491 = vand.u32 %v417, 2147483648
  %v492 = vor.u32 1.1754944e-38, %v491
  %v493 = vsel %vm490, %v492, %v488
  %v494 = vmul.f32 1.0, %v493
  %v495 = vrcp.pop %v418
  %v496 = vmul.f32 %v418, %v495
  %v497 = vsub.f32 1.0, %v496
  %v498 = vmul.f32 %v495, %v497
  %v499 = vadd.f32 %v495, %v498
  %vm500 = vweird.f32 %v418
  %vm501 = vweird.f32 %v495
  %vm502 = vmor %vm500, %vm501
  %v503 = vsel %vm502, %v495, %v499
  %v504 = vand.u32 2147483647, %v418
  %vm505 = vcmp.eq.f32.partialorder %v504, 8.507059e+37
  %v506 = vand.u32 %v418, 2147483648
  %v507 = vor.u32 1.1754944e-38, %v506
  %v508 = vsel %vm505, %v507, %v503
  %v509 = vmul.f32 1.0, %v508
  %v510 = vrcp.pop %v419
  %v511 = vmul.f32 %v419, %v510
  %v512 = vsub.f32 1.0, %v511
  %v513 = vmul.f32 %v510, %v512
  %v514 = vadd.f32 %v510, %v513
  %vm515 = vweird.f32 %v419
  %vm516 = vweird.f32 %v510
  %vm517 = vmor %vm515, %vm516
  %v518 = vsel %vm517, %v510, %v514
  %v519 = vand.u32 2147483647, %v419
  %vm520 = vcmp.eq.f32.partialorder %v519, 8.507059e+37
  %v521 = vand.u32 %v419, 2147483648
  %v522 = vor.u32 1.1754944e-38, %v521
  %v523 = vsel %vm520, %v522, %v518
  %v524 = vmul.f32 1.0, %v523
  %vm525 = vcmp.ge.f32.partialorder %v365, 0.0
  %vm526 = vcmp.ge.f32.partialorder %v368, 0.0
  %vm527 = vcmp.ge.f32.partialorder %v371, 0.0
  %vm528 = vcmp.ge.f32.partialorder %v374, 0.0
  %vm529 = vcmp.ge.f32.partialorder %v377, 0.0
  %vm530 = vcmp.ge.f32.partialorder %v380, 0.0
  %vm531 = vcmp.ge.f32.partialorder %v383, 0.0
  %v532 = vsub.f32 1.0, %v434
  %v533 = vsub.f32 1.0, %v449
  %v534 = vsub.f32 1.0, %v464
  %v535 = vsub.f32 1.0, %v479
  %v536 = vsub.f32 1.0, %v494
  %v537 = vsub.f32 1.0, %v509
  %v538 = vsub.f32 1.0, %v524
  %v539 = vsel %vm525, %v434, %v532
  %v540 = vsel %vm526, %v449, %v533
  %v541 = vsel %vm527, %v464, %v534
  %v542 = vsel %vm528, %v479, %v535
  %v543 = vsel %vm529, %v494, %v536
  %v544 = vsel %vm530, %v509, %v537
  %v545 = vsel %vm531, %v524, %v538
  %v546 = vadd.f32 %v287, %v539
  %v547 = vadd.f32 %v288, %v540
  %v548 = vadd.f32 %v289, %v541
  %v549 = vadd.f32 %v290, %v542
  %v550 = vadd.f32 %v291, %v543
  %v551 = vadd.f32 %v292, %v544
  %v552 = vadd.f32 %v293, %v545
  %s553 = scalar_lea.vmem %s0, 224
  %v554 = vld [vmem:[%s553] sm:$0xff]
  %v555 = vld [vmem:[%s553 + $0x8] sm:$0xff]
  %v556 = vld [vmem:[%s553 + $0x10] sm:$0xff]
  %v557 = vld [vmem:[%s553 + $0x18] sm:$0xff]
  %v558 = vld [vmem:[%s553 + $0x20] sm:$0xff]
  %v559 = vld [vmem:[%s553 + $0x28] sm:$0xff]
  %v560 = vld [vmem:[%s553 + $0x30] sm:$0xff]
  %v561 = vld [vmem:[%s553 + $0x38] sm:$0xff]
  %v562 = vld [vmem:[%s553 + $0x40] sm:$0xff]
  %v563 = vld [vmem:[%s553 + $0x48] sm:$0xff]
  %v564 = vld [vmem:[%s553 + $0x50] sm:$0xff]
  %v565 = vld [vmem:[%s553 + $0x58] sm:$0xff]
  %v566 = vld [vmem:[%s553 + $0x60] sm:$0xff]
  %v567 = vld [vmem:[%s553 + $0x68] sm:$0xff]
  %568 = vmatpush.msra.mxu0 %v26
  %569 = vmatpush.msra.mxu0 %v25
  %570 = vmatpush.msra.mxu0 %v24
  %571 = vmatpush.msra.mxu0 %v23
  %572 = vmatpush.msra.mxu0 %v22
  %573 = vmatpush.msra.mxu0 %v21
  %574 = vmatpush.msra.mxu0 %v20
  %575 = vmatpush.msra.mxu0 %v19
  %576 = vmatpush.msra.mxu0 %v18
  %577 = vmatpush.msra.mxu0 %v17
  %578 = vmatpush.msra.mxu0 %v16
  %579 = vmatpush.msra.mxu0 %v15
  %580 = vmatpush.msra.mxu0 %v14
  %581 = vmatpush.msra.mxu0 %v13
  %582 = vmatpush.msra.mxu0 %v12
  %583 = vmatpush.msra.mxu0 %v11
  %584 = vmatmul.f32.gmra.mxu0 %v554
  %v585 = vpop.f32.mrf.mxu0
  %v586 = vadd.f32 0.0, %v585
  %587 = vmatmul.f32.gmra.mxu0 %v556
  %v588 = vpop.f32.mrf.mxu0
  %v589 = vadd.f32 0.0, %v588
  %590 = vmatmul.f32.gmra.mxu0 %v558
  %v591 = vpop.f32.mrf.mxu0
  %v592 = vadd.f32 0.0, %v591
  %593 = vmatmul.f32.gmra.mxu0 %v560
  %v594 = vpop.f32.mrf.mxu0
  %v595 = vadd.f32 0.0, %v594
  %596 = vmatmul.f32.gmra.mxu0 %v562
  %v597 = vpop.f32.mrf.mxu0
  %v598 = vadd.f32 0.0, %v597
  %599 = vmatmul.f32.gmra.mxu0 %v564
  %v600 = vpop.f32.mrf.mxu0
  %v601 = vadd.f32 0.0, %v600
  %602 = vmatmul.f32.gmra.mxu0 %v566
  %v603 = vpop.f32.mrf.mxu0
  %v604 = vadd.f32 0.0, %v603
  %605 = vdwg.mxu0
  %606 = vmatpush.msra.mxu0 %v42
  %607 = vmatpush.msra.mxu0 %v41
  %608 = vmatpush.msra.mxu0 %v40
  %609 = vmatpush.msra.mxu0 %v39
  %610 = vmatpush.msra.mxu0 %v38
  %611 = vmatpush.msra.mxu0 %v37
  %612 = vmatpush.msra.mxu0 %v36
  %613 = vmatpush.msra.mxu0 %v35
  %614 = vmatpush.msra.mxu0 %v34
  %615 = vmatpush.msra.mxu0 %v33
  %616 = vmatpush.msra.mxu0 %v32
  %617 = vmatpush.msra.mxu0 %v31
  %618 = vmatpush.msra.mxu0 %v30
  %619 = vmatpush.msra.mxu0 %v29
  %620 = vmatpush.msra.mxu0 %v28
  %621 = vmatpush.msra.mxu0 %v27
  %622 = vmatmul.f32.gmra.mxu0 %v555
  %v623 = vpop.f32.mrf.mxu0
  %v624 = vadd.f32 %v586, %v623
  %625 = vmatmul.f32.gmra.mxu0 %v557
  %v626 = vpop.f32.mrf.mxu0
  %v627 = vadd.f32 %v589, %v626
  %628 = vmatmul.f32.gmra.mxu0 %v559
  %v629 = vpop.f32.mrf.mxu0
  %v630 = vadd.f32 %v592, %v629
  %631 = vmatmul.f32.gmra.mxu0 %v561
  %v632 = vpop.f32.mrf.mxu0
  %v633 = vadd.f32 %v595, %v632
  %634 = vmatmul.f32.gmra.mxu0 %v563
  %v635 = vpop.f32.mrf.mxu0
  %v636 = vadd.f32 %v598, %v635
  %637 = vmatmul.f32.gmra.mxu0 %v565
  %v638 = vpop.f32.mrf.mxu0
  %v639 = vadd.f32 %v601, %v638
  %640 = vmatmul.f32.gmra.mxu0 %v567
  %v641 = vpop.f32.mrf.mxu0
  %v642 = vadd.f32 %v604, %v641
  %643 = vdwg.mxu0
  %v644 = vand.u32 2147483647, %v624
  %v645 = vand.u32 2147483647, %v627
  %v646 = vand.u32 2147483647, %v630
  %v647 = vand.u32 2147483647, %v633
  %v648 = vand.u32 2147483647, %v636
  %v649 = vand.u32 2147483647, %v639
  %v650 = vand.u32 2147483647, %v642
  %v651 = vsub.f32 0.0, %v644
  %v652 = vsub.f32 0.0, %v645
  %v653 = vsub.f32 0.0, %v646
  %v654 = vsub.f32 0.0, %v647
  %v655 = vsub.f32 0.0, %v648
  %v656 = vsub.f32 0.0, %v649
  %v657 = vsub.f32 0.0, %v650
  %v658 = vmul.f32 %v651, 1.442695
  %v659 = vpow.pop %v658
  %v660 = vmul.f32 %v652, 1.442695
  %v661 = vpow.pop %v660
  %v662 = vmul.f32 %v653, 1.442695
  %v663 = vpow.pop %v662
  %v664 = vmul.f32 %v654, 1.442695
  %v665 = vpow.pop %v664
  %v666 = vmul.f32 %v655, 1.442695
  %v667 = vpow.pop %v666
  %v668 = vmul.f32 %v656, 1.442695
  %v669 = vpow.pop %v668
  %v670 = vmul.f32 %v657, 1.442695
  %v671 = vpow.pop %v670
  %v672 = vadd.f32 %v659, 1.0
  %v673 = vadd.f32 %v661, 1.0
  %v674 = vadd.f32 %v663, 1.0
  %v675 = vadd.f32 %v665, 1.0
  %v676 = vadd.f32 %v667, 1.0
  %v677 = vadd.f32 %v669, 1.0
  %v678 = vadd.f32 %v671, 1.0
  %v679 = vrcp.pop %v672
  %v680 = vmul.f32 %v672, %v679
  %v681 = vsub.f32 1.0, %v680
  %v682 = vmul.f32 %v679, %v681
  %v683 = vadd.f32 %v679, %v682
  %vm684 = vweird.f32 %v672
  %vm685 = vweird.f32 %v679
  %vm686 = vmor %vm684, %vm685
  %v687 = vsel %vm686, %v679, %v683
  %v688 = vand.u32 2147483647, %v672
  %vm689 = vcmp.eq.f32.partialorder %v688, 8.507059e+37
  %v690 = vand.u32 %v672, 2147483648
  %v691 = vor.u32 1.1754944e-38, %v690
  %v692 = vsel %vm689, %v691, %v687
  %v693 = vmul.f32 1.0, %v692
  %v694 = vrcp.pop %v673
  %v695 = vmul.f32 %v673, %v694
  %v696 = vsub.f32 1.0, %v695
  %v697 = vmul.f32 %v694, %v696
  %v698 = vadd.f32 %v694, %v697
  %vm699 = vweird.f32 %v673
  %vm700 = vweird.f32 %v694
  %vm701 = vmor %vm699, %vm700
  %v702 = vsel %vm701, %v694, %v698
  %v703 = vand.u32 2147483647, %v673
  %vm704 = vcmp.eq.f32.partialorder %v703, 8.507059e+37
  %v705 = vand.u32 %v673, 2147483648
  %v706 = vor.u32 1.1754944e-38, %v705
  %v707 = vsel %vm704, %v706, %v702
  %v708 = vmul.f32 1.0, %v707
  %v709 = vrcp.pop %v674
  %v710 = vmul.f32 %v674, %v709
  %v711 = vsub.f32 1.0, %v710
  %v712 = vmul.f32 %v709, %v711
  %v713 = vadd.f32 %v709, %v712
  %vm714 = vweird.f32 %v674
  %vm715 = vweird.f32 %v709
  %vm716 = vmor %vm714, %vm715
  %v717 = vsel %vm716, %v709, %v713
  %v718 = vand.u32 2147483647, %v674
  %vm719 = vcmp.eq.f32.partialorder %v718, 8.507059e+37
  %v720 = vand.u32 %v674, 2147483648
  %v721 = vor.u32 1.1754944e-38, %v720
  %v722 = vsel %vm719, %v721, %v717
  %v723 = vmul.f32 1.0, %v722
  %v724 = vrcp.pop %v675
  %v725 = vmul.f32 %v675, %v724
  %v726 = vsub.f32 1.0, %v725
  %v727 = vmul.f32 %v724, %v726
  %v728 = vadd.f32 %v724, %v727
  %vm729 = vweird.f32 %v675
  %vm730 = vweird.f32 %v724
  %vm731 = vmor %vm729, %vm730
  %v732 = vsel %vm731, %v724, %v728
  %v733 = vand.u32 2147483647, %v675
  %vm734 = vcmp.eq.f32.partialorder %v733, 8.507059e+37
  %v735 = vand.u32 %v675, 2147483648
  %v736 = vor.u32 1.1754944e-38, %v735
  %v737 = vsel %vm734, %v736, %v732
  %v738 = vmul.f32 1.0, %v737
  %v739 = vrcp.pop %v676
  %v740 = vmul.f32 %v676, %v739
  %v741 = vsub.f32 1.0, %v740
  %v742 = vmul.f32 %v739, %v741
  %v743 = vadd.f32 %v739, %v742
  %vm744 = vweird.f32 %v676
  %vm745 = vweird.f32 %v739
  %vm746 = vmor %vm744, %vm745
  %v747 = vsel %vm746, %v739, %v743
  %v748 = vand.u32 2147483647, %v676
  %vm749 = vcmp.eq.f32.partialorder %v748, 8.507059e+37
  %v750 = vand.u32 %v676, 2147483648
  %v751 = vor.u32 1.1754944e-38, %v750
  %v752 = vsel %vm749, %v751, %v747
  %v753 = vmul.f32 1.0, %v752
  %v754 = vrcp.pop %v677
  %v755 = vmul.f32 %v677, %v754
  %v756 = vsub.f32 1.0, %v755
  %v757 = vmul.f32 %v754, %v756
  %v758 = vadd.f32 %v754, %v757
  %vm759 = vweird.f32 %v677
  %vm760 = vweird.f32 %v754
  %vm761 = vmor %vm759, %vm760
  %v762 = vsel %vm761, %v754, %v758
  %v763 = vand.u32 2147483647, %v677
  %vm764 = vcmp.eq.f32.partialorder %v763, 8.507059e+37
  %v765 = vand.u32 %v677, 2147483648
  %v766 = vor.u32 1.1754944e-38, %v765
  %v767 = vsel %vm764, %v766, %v762
  %v768 = vmul.f32 1.0, %v767
  %v769 = vrcp.pop %v678
  %v770 = vmul.f32 %v678, %v769
  %v771 = vsub.f32 1.0, %v770
  %v772 = vmul.f32 %v769, %v771
  %v773 = vadd.f32 %v769, %v772
  %vm774 = vweird.f32 %v678
  %vm775 = vweird.f32 %v769
  %vm776 = vmor %vm774, %vm775
  %v777 = vsel %vm776, %v769, %v773
  %v778 = vand.u32 2147483647, %v678
  %vm779 = vcmp.eq.f32.partialorder %v778, 8.507059e+37
  %v780 = vand.u32 %v678, 2147483648
  %v781 = vor.u32 1.1754944e-38, %v780
  %v782 = vsel %vm779, %v781, %v777
  %v783 = vmul.f32 1.0, %v782
  %vm784 = vcmp.ge.f32.partialorder %v624, 0.0
  %vm785 = vcmp.ge.f32.partialorder %v627, 0.0
  %vm786 = vcmp.ge.f32.partialorder %v630, 0.0
  %vm787 = vcmp.ge.f32.partialorder %v633, 0.0
  %vm788 = vcmp.ge.f32.partialorder %v636, 0.0
  %vm789 = vcmp.ge.f32.partialorder %v639, 0.0
  %vm790 = vcmp.ge.f32.partialorder %v642, 0.0
  %v791 = vsub.f32 1.0, %v693
  %v792 = vsub.f32 1.0, %v708
  %v793 = vsub.f32 1.0, %v723
  %v794 = vsub.f32 1.0, %v738
  %v795 = vsub.f32 1.0, %v753
  %v796 = vsub.f32 1.0, %v768
  %v797 = vsub.f32 1.0, %v783
  %v798 = vsel %vm784, %v693, %v791
  %v799 = vsel %vm785, %v708, %v792
  %v800 = vsel %vm786, %v723, %v793
  %v801 = vsel %vm787, %v738, %v794
  %v802 = vsel %vm788, %v753, %v795
  %v803 = vsel %vm789, %v768, %v796
  %v804 = vsel %vm790, %v783, %v797
  %v805 = vadd.f32 %v546, %v798
  %v806 = vadd.f32 %v547, %v799
  %v807 = vadd.f32 %v548, %v800
  %v808 = vadd.f32 %v549, %v801
  %v809 = vadd.f32 %v550, %v802
  %v810 = vadd.f32 %v551, %v803
  %v811 = vadd.f32 %v552, %v804
  %s812 = scalar_lea.vmem %s0, 336
  %v813 = vld [vmem:[%s812] sm:$0xff]
  %v814 = vld [vmem:[%s812 + $0x8] sm:$0xff]
  %v815 = vld [vmem:[%s812 + $0x10] sm:$0xff]
  %v816 = vld [vmem:[%s812 + $0x18] sm:$0xff]
  %v817 = vld [vmem:[%s812 + $0x20] sm:$0xff]
  %v818 = vld [vmem:[%s812 + $0x28] sm:$0xff]
  %v819 = vld [vmem:[%s812 + $0x30] sm:$0xff]
  %v820 = vld [vmem:[%s812 + $0x38] sm:$0xff]
  %v821 = vld [vmem:[%s812 + $0x40] sm:$0xff]
  %v822 = vld [vmem:[%s812 + $0x48] sm:$0xff]
  %v823 = vld [vmem:[%s812 + $0x50] sm:$0xff]
  %v824 = vld [vmem:[%s812 + $0x58] sm:$0xff]
  %v825 = vld [vmem:[%s812 + $0x60] sm:$0xff]
  %v826 = vld [vmem:[%s812 + $0x68] sm:$0xff]
  %827 = vmatpush.msra.mxu0 %v26
  %828 = vmatpush.msra.mxu0 %v25
  %829 = vmatpush.msra.mxu0 %v24
  %830 = vmatpush.msra.mxu0 %v23
  %831 = vmatpush.msra.mxu0 %v22
  %832 = vmatpush.msra.mxu0 %v21
  %833 = vmatpush.msra.mxu0 %v20
  %834 = vmatpush.msra.mxu0 %v19
  %835 = vmatpush.msra.mxu0 %v18
  %836 = vmatpush.msra.mxu0 %v17
  %837 = vmatpush.msra.mxu0 %v16
  %838 = vmatpush.msra.mxu0 %v15
  %839 = vmatpush.msra.mxu0 %v14
  %840 = vmatpush.msra.mxu0 %v13
  %841 = vmatpush.msra.mxu0 %v12
  %842 = vmatpush.msra.mxu0 %v11
  %843 = vmatmul.f32.gmra.mxu0 %v813
  %v844 = vpop.f32.mrf.mxu0
  %v845 = vadd.f32 0.0, %v844
  %846 = vmatmul.f32.gmra.mxu0 %v815
  %v847 = vpop.f32.mrf.mxu0
  %v848 = vadd.f32 0.0, %v847
  %849 = vmatmul.f32.gmra.mxu0 %v817
  %v850 = vpop.f32.mrf.mxu0
  %v851 = vadd.f32 0.0, %v850
  %852 = vmatmul.f32.gmra.mxu0 %v819
  %v853 = vpop.f32.mrf.mxu0
  %v854 = vadd.f32 0.0, %v853
  %855 = vmatmul.f32.gmra.mxu0 %v821
  %v856 = vpop.f32.mrf.mxu0
  %v857 = vadd.f32 0.0, %v856
  %858 = vmatmul.f32.gmra.mxu0 %v823
  %v859 = vpop.f32.mrf.mxu0
  %v860 = vadd.f32 0.0, %v859
  %861 = vmatmul.f32.gmra.mxu0 %v825
  %v862 = vpop.f32.mrf.mxu0
  %v863 = vadd.f32 0.0, %v862
  %864 = vdwg.mxu0
  %865 = vmatpush.msra.mxu0 %v42
  %866 = vmatpush.msra.mxu0 %v41
  %867 = vmatpush.msra.mxu0 %v40
  %868 = vmatpush.msra.mxu0 %v39
  %869 = vmatpush.msra.mxu0 %v38
  %870 = vmatpush.msra.mxu0 %v37
  %871 = vmatpush.msra.mxu0 %v36
  %872 = vmatpush.msra.mxu0 %v35
  %873 = vmatpush.msra.mxu0 %v34
  %874 = vmatpush.msra.mxu0 %v33
  %875 = vmatpush.msra.mxu0 %v32
  %876 = vmatpush.msra.mxu0 %v31
  %877 = vmatpush.msra.mxu0 %v30
  %878 = vmatpush.msra.mxu0 %v29
  %879 = vmatpush.msra.mxu0 %v28
  %880 = vmatpush.msra.mxu0 %v27
  %881 = vmatmul.f32.gmra.mxu0 %v814
  %v882 = vpop.f32.mrf.mxu0
  %v883 = vadd.f32 %v845, %v882
  %884 = vmatmul.f32.gmra.mxu0 %v816
  %v885 = vpop.f32.mrf.mxu0
  %v886 = vadd.f32 %v848, %v885
  %887 = vmatmul.f32.gmra.mxu0 %v818
  %v888 = vpop.f32.mrf.mxu0
  %v889 = vadd.f32 %v851, %v888
  %890 = vmatmul.f32.gmra.mxu0 %v820
  %v891 = vpop.f32.mrf.mxu0
  %v892 = vadd.f32 %v854, %v891
  %893 = vmatmul.f32.gmra.mxu0 %v822
  %v894 = vpop.f32.mrf.mxu0
  %v895 = vadd.f32 %v857, %v894
  %896 = vmatmul.f32.gmra.mxu0 %v824
  %v897 = vpop.f32.mrf.mxu0
  %v898 = vadd.f32 %v860, %v897
  %899 = vmatmul.f32.gmra.mxu0 %v826
  %v900 = vpop.f32.mrf.mxu0
  %v901 = vadd.f32 %v863, %v900
  %902 = vdwg.mxu0
  %v903 = vand.u32 2147483647, %v883
  %v904 = vand.u32 2147483647, %v886
  %v905 = vand.u32 2147483647, %v889
  %v906 = vand.u32 2147483647, %v892
  %v907 = vand.u32 2147483647, %v895
  %v908 = vand.u32 2147483647, %v898
  %v909 = vand.u32 2147483647, %v901
  %v910 = vsub.f32 0.0, %v903
  %v911 = vsub.f32 0.0, %v904
  %v912 = vsub.f32 0.0, %v905
  %v913 = vsub.f32 0.0, %v906
  %v914 = vsub.f32 0.0, %v907
  %v915 = vsub.f32 0.0, %v908
  %v916 = vsub.f32 0.0, %v909
  %v917 = vmul.f32 %v910, 1.442695
  %v918 = vpow.pop %v917
  %v919 = vmul.f32 %v911, 1.442695
  %v920 = vpow.pop %v919
  %v921 = vmul.f32 %v912, 1.442695
  %v922 = vpow.pop %v921
  %v923 = vmul.f32 %v913, 1.442695
  %v924 = vpow.pop %v923
  %v925 = vmul.f32 %v914, 1.442695
  %v926 = vpow.pop %v925
  %v927 = vmul.f32 %v915, 1.442695
  %v928 = vpow.pop %v927
  %v929 = vmul.f32 %v916, 1.442695
  %v930 = vpow.pop %v929
  %v931 = vadd.f32 %v918, 1.0
  %v932 = vadd.f32 %v920, 1.0
  %v933 = vadd.f32 %v922, 1.0
  %v934 = vadd.f32 %v924, 1.0
  %v935 = vadd.f32 %v926, 1.0
  %v936 = vadd.f32 %v928, 1.0
  %v937 = vadd.f32 %v930, 1.0
  %v938 = vrcp.pop %v931
  %v939 = vmul.f32 %v931, %v938
  %v940 = vsub.f32 1.0, %v939
  %v941 = vmul.f32 %v938, %v940
  %v942 = vadd.f32 %v938, %v941
  %vm943 = vweird.f32 %v931
  %vm944 = vweird.f32 %v938
  %vm945 = vmor %vm943, %vm944
  %v946 = vsel %vm945, %v938, %v942
  %v947 = vand.u32 2147483647, %v931
  %vm948 = vcmp.eq.f32.partialorder %v947, 8.507059e+37
  %v949 = vand.u32 %v931, 2147483648
  %v950 = vor.u32 1.1754944e-38, %v949
  %v951 = vsel %vm948, %v950, %v946
  %v952 = vmul.f32 1.0, %v951
  %v953 = vrcp.pop %v932
  %v954 = vmul.f32 %v932, %v953
  %v955 = vsub.f32 1.0, %v954
  %v956 = vmul.f32 %v953, %v955
  %v957 = vadd.f32 %v953, %v956
  %vm958 = vweird.f32 %v932
  %vm959 = vweird.f32 %v953
  %vm960 = vmor %vm958, %vm959
  %v961 = vsel %vm960, %v953, %v957
  %v962 = vand.u32 2147483647, %v932
  %vm963 = vcmp.eq.f32.partialorder %v962, 8.507059e+37
  %v964 = vand.u32 %v932, 2147483648
  %v965 = vor.u32 1.1754944e-38, %v964
  %v966 = vsel %vm963, %v965, %v961
  %v967 = vmul.f32 1.0, %v966
  %v968 = vrcp.pop %v933
  %v969 = vmul.f32 %v933, %v968
  %v970 = vsub.f32 1.0, %v969
  %v971 = vmul.f32 %v968, %v970
  %v972 = vadd.f32 %v968, %v971
  %vm973 = vweird.f32 %v933
  %vm974 = vweird.f32 %v968
  %vm975 = vmor %vm973, %vm974
  %v976 = vsel %vm975, %v968, %v972
  %v977 = vand.u32 2147483647, %v933
  %vm978 = vcmp.eq.f32.partialorder %v977, 8.507059e+37
  %v979 = vand.u32 %v933, 2147483648
  %v980 = vor.u32 1.1754944e-38, %v979
  %v981 = vsel %vm978, %v980, %v976
  %v982 = vmul.f32 1.0, %v981
  %v983 = vrcp.pop %v934
  %v984 = vmul.f32 %v934, %v983
  %v985 = vsub.f32 1.0, %v984
  %v986 = vmul.f32 %v983, %v985
  %v987 = vadd.f32 %v983, %v986
  %vm988 = vweird.f32 %v934
  %vm989 = vweird.f32 %v983
  %vm990 = vmor %vm988, %vm989
  %v991 = vsel %vm990, %v983, %v987
  %v992 = vand.u32 2147483647, %v934
  %vm993 = vcmp.eq.f32.partialorder %v992, 8.507059e+37
  %v994 = vand.u32 %v934, 2147483648
  %v995 = vor.u32 1.1754944e-38, %v994
  %v996 = vsel %vm993, %v995, %v991
  %v997 = vmul.f32 1.0, %v996
  %v998 = vrcp.pop %v935
  %v999 = vmul.f32 %v935, %v998
  %v1000 = vsub.f32 1.0, %v999
  %v1001 = vmul.f32 %v998, %v1000
  %v1002 = vadd.f32 %v998, %v1001
  %vm1003 = vweird.f32 %v935
  %vm1004 = vweird.f32 %v998
  %vm1005 = vmor %vm1003, %vm1004
  %v1006 = vsel %vm1005, %v998, %v1002
  %v1007 = vand.u32 2147483647, %v935
  %vm1008 = vcmp.eq.f32.partialorder %v1007, 8.507059e+37
  %v1009 = vand.u32 %v935, 2147483648
  %v1010 = vor.u32 1.1754944e-38, %v1009
  %v1011 = vsel %vm1008, %v1010, %v1006
  %v1012 = vmul.f32 1.0, %v1011
  %v1013 = vrcp.pop %v936
  %v1014 = vmul.f32 %v936, %v1013
  %v1015 = vsub.f32 1.0, %v1014
  %v1016 = vmul.f32 %v1013, %v1015
  %v1017 = vadd.f32 %v1013, %v1016
  %vm1018 = vweird.f32 %v936
  %vm1019 = vweird.f32 %v1013
  %vm1020 = vmor %vm1018, %vm1019
  %v1021 = vsel %vm1020, %v1013, %v1017
  %v1022 = vand.u32 2147483647, %v936
  %vm1023 = vcmp.eq.f32.partialorder %v1022, 8.507059e+37
  %v1024 = vand.u32 %v936, 2147483648
  %v1025 = vor.u32 1.1754944e-38, %v1024
  %v1026 = vsel %vm1023, %v1025, %v1021
  %v1027 = vmul.f32 1.0, %v1026
  %v1028 = vrcp.pop %v937
  %v1029 = vmul.f32 %v937, %v1028
  %v1030 = vsub.f32 1.0, %v1029
  %v1031 = vmul.f32 %v1028, %v1030
  %v1032 = vadd.f32 %v1028, %v1031
  %vm1033 = vweird.f32 %v937
  %vm1034 = vweird.f32 %v1028
  %vm1035 = vmor %vm1033, %vm1034
  %v1036 = vsel %vm1035, %v1028, %v1032
  %v1037 = vand.u32 2147483647, %v937
  %vm1038 = vcmp.eq.f32.partialorder %v1037, 8.507059e+37
  %v1039 = vand.u32 %v937, 2147483648
  %v1040 = vor.u32 1.1754944e-38, %v1039
  %v1041 = vsel %vm1038, %v1040, %v1036
  %v1042 = vmul.f32 1.0, %v1041
  %vm1043 = vcmp.ge.f32.partialorder %v883, 0.0
  %vm1044 = vcmp.ge.f32.partialorder %v886, 0.0
  %vm1045 = vcmp.ge.f32.partialorder %v889, 0.0
  %vm1046 = vcmp.ge.f32.partialorder %v892, 0.0
  %vm1047 = vcmp.ge.f32.partialorder %v895, 0.0
  %vm1048 = vcmp.ge.f32.partialorder %v898, 0.0
  %vm1049 = vcmp.ge.f32.partialorder %v901, 0.0
  %v1050 = vsub.f32 1.0, %v952
  %v1051 = vsub.f32 1.0, %v967
  %v1052 = vsub.f32 1.0, %v982
  %v1053 = vsub.f32 1.0, %v997
  %v1054 = vsub.f32 1.0, %v1012
  %v1055 = vsub.f32 1.0, %v1027
  %v1056 = vsub.f32 1.0, %v1042
  %v1057 = vsel %vm1043, %v952, %v1050
  %v1058 = vsel %vm1044, %v967, %v1051
  %v1059 = vsel %vm1045, %v982, %v1052
  %v1060 = vsel %vm1046, %v997, %v1053
  %v1061 = vsel %vm1047, %v1012, %v1054
  %v1062 = vsel %vm1048, %v1027, %v1055
  %v1063 = vsel %vm1049, %v1042, %v1056
  %v1064 = vadd.f32 %v805, %v1057
  %v1065 = vadd.f32 %v806, %v1058
  %v1066 = vadd.f32 %v807, %v1059
  %v1067 = vadd.f32 %v808, %v1060
  %v1068 = vadd.f32 %v809, %v1061
  %v1069 = vadd.f32 %v810, %v1062
  %v1070 = vadd.f32 %v811, %v1063
  %v1071 = vmul.f32 %v1064, 0.25
  %v1072 = vmul.f32 %v1065, 0.25
  %v1073 = vmul.f32 %v1066, 0.25
  %v1074 = vmul.f32 %v1067, 0.25
  %v1075 = vmul.f32 %v1068, 0.25
  %v1076 = vmul.f32 %v1069, 0.25
  %v1077 = vmul.f32 %v1070, 0.25
  %1078 = vst [vmem:[%s2] sm:$0xff] %v1071
  %1079 = vst [vmem:[%s2 + $0x8] sm:$0xff] %v1072
  %1080 = vst [vmem:[%s2 + $0x10] sm:$0xff] %v1073
  %1081 = vst [vmem:[%s2 + $0x18] sm:$0xff] %v1074
  %1082 = vst [vmem:[%s2 + $0x20] sm:$0xff] %v1075
  %1083 = vst [vmem:[%s2 + $0x28] sm:$0xff] %v1076
  %1084 = vst [vmem:[%s2 + $0x30] sm:$0xff] %v1077
  // Predicated region
  $region10: #{lenet_loss_pallas.4} parent=0 // pred_check
    _
  $region11: #{lenet_loss_pallas.4} parent=0 // pred_check_branch
    %1086 = sbr.rel (0) target = $region13
  $region12: #{lenet_loss_pallas.4} parent=0 // pred_region
    _
  $region13: #{lenet_loss_pallas.4} parent=0 // pred_fallthru
    _
  // Predicated region
  $region14: #{lenet_loss_pallas.4} parent=0 // pred_check
    _
  $region15: #{lenet_loss_pallas.4} parent=0 // pred_check_branch
    %1088 = sbr.rel (0) target = $region17
  $region16: #{lenet_loss_pallas.4} parent=0 // pred_region
    _
  $region17: #{lenet_loss_pallas.4} parent=0 // pred_fallthru
    _

// kernel: lenet_loss_pallas.5
$region0: #{lenet_loss_pallas.5}
  #allocation0 [shape = 'u32[]', space=smem, size = 0x4, offset = 0x4, fixed_abs, tag = 'smem constant byte address 0x4 - core index']
  #allocation1 [shape = 'u32[72,128]{1,0:T(1,128)}', space=vmem, size = 0x9000, scoped, tag = 'internal scratch']
  %s0 = inlined_call_operand.vmem [shape: f32[8,512], index: 0, kind: input, shape index: {}]
  %s1 = inlined_call_operand.vmem [shape: f32[512,128], index: 1, kind: input, shape index: {}]
  %s2 = inlined_call_operand.vmem [shape: f32[1,128], index: 2, kind: input, shape index: {}]
  %s3 = inlined_call_operand.vmem [shape: f32[128,128], index: 3, kind: input, shape index: {}]
  %s4 = inlined_call_operand.vmem [shape: f32[1,128], index: 4, kind: input, shape index: {}]
  %s5 = inlined_call_operand.vmem [shape: f32[128,128], index: 5, kind: input, shape index: {}]
  %s6 = inlined_call_operand.vmem [shape: f32[1,128], index: 6, kind: input, shape index: {}]
  %s7 = inlined_call_operand.vmem [shape: f32[8,128], index: 7, kind: input, shape index: {}]
  %s8 = inlined_call_operand.hbm [shape: f32[1], index: 8, kind: output, shape index: {}]
  %s9 = sld [smem:[#allocation0]]
  $region42: #{lenet_loss_pallas.5} parent=0
    _
  %s11 = ssub.s32 1, %s9
  %s12 = scalar_select 0, %s11, %s9
  $region1: #{lenet_loss_pallas.5} parent=0
    #allocation2 [shape = 'u8[512]{0}', space=smem, size = 0x200, scoped, tag = 'output window, operand 0, single buffered']
    #allocation3 [shape = 's32[1]{0}', space=sflag, size = 0x4, scoped, tag = 'scoped memory for lenet_loss_pallas.5']
    %13 = vsyncpa [#allocation3], 0
    // Predicated region
    $region2: #{lenet_loss_pallas.5} parent=1 // pred_check
      _
    $region3: #{lenet_loss_pallas.5} parent=1 // pred_check_branch
      %15 = sbr.rel (0) target = $region5
    $region4: #{lenet_loss_pallas.5} parent=1 // pred_region
      _
    $region5: #{lenet_loss_pallas.5} parent=1 // pred_fallthru
      _
    // Predicated region
    $region6: #{lenet_loss_pallas.5} parent=1 // pred_check
      _
    $region7: #{lenet_loss_pallas.5} parent=1 // pred_check_branch
      %17 = sbr.rel (0) target = $region9
    $region8: #{lenet_loss_pallas.5} parent=1 // pred_region
      _
    $region9: #{lenet_loss_pallas.5} parent=1 // pred_fallthru
      _
    // Predicated region
    $region10: #{lenet_loss_pallas.5} parent=1 // pred_check
      _
    $region11: #{lenet_loss_pallas.5} parent=1 // pred_check_branch
      %19 = sbr.rel (0) target = $region13
    $region12: #{lenet_loss_pallas.5} parent=1 // pred_region
      _
    $region13: #{lenet_loss_pallas.5} parent=1 // pred_fallthru
      _
    // Predicated region
    $region14: #{lenet_loss_pallas.5} parent=1 // pred_check
      _
    $region15: #{lenet_loss_pallas.5} parent=1 // pred_check_branch
      %21 = sbr.rel (0) target = $region17
    $region16: #{lenet_loss_pallas.5} parent=1 // pred_region
      _
    $region17: #{lenet_loss_pallas.5} parent=1 // pred_fallthru
      _
    // Predicated region
    $region18: #{lenet_loss_pallas.5} parent=1 // pred_check
      _
    $region19: #{lenet_loss_pallas.5} parent=1 // pred_check_branch
      %23 = sbr.rel (0) target = $region21
    $region20: #{lenet_loss_pallas.5} parent=1 // pred_region
      _
    $region21: #{lenet_loss_pallas.5} parent=1 // pred_fallthru
      _
    // Predicated region
    $region22: #{lenet_loss_pallas.5} parent=1 // pred_check
      _
    $region23: #{lenet_loss_pallas.5} parent=1 // pred_check_branch
      %25 = sbr.rel (0) target = $region25
    $region24: #{lenet_loss_pallas.5} parent=1 // pred_region
      _
    $region25: #{lenet_loss_pallas.5} parent=1 // pred_fallthru
      _
    // Predicated region
    $region26: #{lenet_loss_pallas.5} parent=1 // pred_check
      _
    $region27: #{lenet_loss_pallas.5} parent=1 // pred_check_branch
      %27 = sbr.rel (0) target = $region29
    $region28: #{lenet_loss_pallas.5} parent=1 // pred_region
      _
    $region29: #{lenet_loss_pallas.5} parent=1 // pred_fallthru
      _
    // Predicated region
    $region30: #{lenet_loss_pallas.5} parent=1 // pred_check
      _
    $region31: #{lenet_loss_pallas.5} parent=1 // pred_check_branch
      %29 = sbr.rel (0) target = $region33
    $region32: #{lenet_loss_pallas.5} parent=1 // pred_region
      _
    $region33: #{lenet_loss_pallas.5} parent=1 // pred_fallthru
      _
    %v30 = vld [vmem:[%s0] sm:$0xff]
    %v31 = vld [vmem:[%s0 + $0x8] sm:$0xff]
    %v32 = vld [vmem:[%s0 + $0x10] sm:$0xff]
    %v33 = vld [vmem:[%s0 + $0x18] sm:$0xff]
    %v34 = vld [vmem:[%s1] sm:$0xff]
    %v35 = vld [vmem:[%s1 + $0x8] sm:$0xff]
    %v36 = vld [vmem:[%s1 + $0x10] sm:$0xff]
    %v37 = vld [vmem:[%s1 + $0x18] sm:$0xff]
    %v38 = vld [vmem:[%s1 + $0x20] sm:$0xff]
    %v39 = vld [vmem:[%s1 + $0x28] sm:$0xff]
    %v40 = vld [vmem:[%s1 + $0x30] sm:$0xff]
    %v41 = vld [vmem:[%s1 + $0x38] sm:$0xff]
    %v42 = vld [vmem:[%s1 + $0x40] sm:$0xff]
    %v43 = vld [vmem:[%s1 + $0x48] sm:$0xff]
    %v44 = vld [vmem:[%s1 + $0x50] sm:$0xff]
    %v45 = vld [vmem:[%s1 + $0x58] sm:$0xff]
    %v46 = vld [vmem:[%s1 + $0x60] sm:$0xff]
    %v47 = vld [vmem:[%s1 + $0x68] sm:$0xff]
    %v48 = vld [vmem:[%s1 + $0x70] sm:$0xff]
    %v49 = vld [vmem:[%s1 + $0x78] sm:$0xff]
    %v50 = vld [vmem:[%s1 + $0x80] sm:$0xff]
    %v51 = vld [vmem:[%s1 + $0x88] sm:$0xff]
    %v52 = vld [vmem:[%s1 + $0x90] sm:$0xff]
    %v53 = vld [vmem:[%s1 + $0x98] sm:$0xff]
    %v54 = vld [vmem:[%s1 + $0xa0] sm:$0xff]
    %v55 = vld [vmem:[%s1 + $0xa8] sm:$0xff]
    %v56 = vld [vmem:[%s1 + $0xb0] sm:$0xff]
    %v57 = vld [vmem:[%s1 + $0xb8] sm:$0xff]
    %v58 = vld [vmem:[%s1 + $0xc0] sm:$0xff]
    %v59 = vld [vmem:[%s1 + $0xc8] sm:$0xff]
    %v60 = vld [vmem:[%s1 + $0xd0] sm:$0xff]
    %v61 = vld [vmem:[%s1 + $0xd8] sm:$0xff]
    %v62 = vld [vmem:[%s1 + $0xe0] sm:$0xff]
    %v63 = vld [vmem:[%s1 + $0xe8] sm:$0xff]
    %v64 = vld [vmem:[%s1 + $0xf0] sm:$0xff]
    %v65 = vld [vmem:[%s1 + $0xf8] sm:$0xff]
    %v66 = vld [vmem:[%s1 + $0x100] sm:$0xff]
    %v67 = vld [vmem:[%s1 + $0x108] sm:$0xff]
    %v68 = vld [vmem:[%s1 + $0x110] sm:$0xff]
    %v69 = vld [vmem:[%s1 + $0x118] sm:$0xff]
    %v70 = vld [vmem:[%s1 + $0x120] sm:$0xff]
    %v71 = vld [vmem:[%s1 + $0x128] sm:$0xff]
    %v72 = vld [vmem:[%s1 + $0x130] sm:$0xff]
    %v73 = vld [vmem:[%s1 + $0x138] sm:$0xff]
    %v74 = vld [vmem:[%s1 + $0x140] sm:$0xff]
    %v75 = vld [vmem:[%s1 + $0x148] sm:$0xff]
    %v76 = vld [vmem:[%s1 + $0x150] sm:$0xff]
    %v77 = vld [vmem:[%s1 + $0x158] sm:$0xff]
    %v78 = vld [vmem:[%s1 + $0x160] sm:$0xff]
    %v79 = vld [vmem:[%s1 + $0x168] sm:$0xff]
    %v80 = vld [vmem:[%s1 + $0x170] sm:$0xff]
    %v81 = vld [vmem:[%s1 + $0x178] sm:$0xff]
    %v82 = vld [vmem:[%s1 + $0x180] sm:$0xff]
    %v83 = vld [vmem:[%s1 + $0x188] sm:$0xff]
    %v84 = vld [vmem:[%s1 + $0x190] sm:$0xff]
    %v85 = vld [vmem:[%s1 + $0x198] sm:$0xff]
    %v86 = vld [vmem:[%s1 + $0x1a0] sm:$0xff]
    %v87 = vld [vmem:[%s1 + $0x1a8] sm:$0xff]
    %v88 = vld [vmem:[%s1 + $0x1b0] sm:$0xff]
    %v89 = vld [vmem:[%s1 + $0x1b8] sm:$0xff]
    %v90 = vld [vmem:[%s1 + $0x1c0] sm:$0xff]
    %v91 = vld [vmem:[%s1 + $0x1c8] sm:$0xff]
    %v92 = vld [vmem:[%s1 + $0x1d0] sm:$0xff]
    %v93 = vld [vmem:[%s1 + $0x1d8] sm:$0xff]
    %v94 = vld [vmem:[%s1 + $0x1e0] sm:$0xff]
    %v95 = vld [vmem:[%s1 + $0x1e8] sm:$0xff]
    %v96 = vld [vmem:[%s1 + $0x1f0] sm:$0xff]
    %v97 = vld [vmem:[%s1 + $0x1f8] sm:$0xff]
    %v98 = vld [vmem:[%s2] sm:$0x1]
    %v100 = vperm.slane %v98, 0
    %102 = vmatpush.msra.mxu0 %v49
    %103 = vmatpush.msra.mxu0 %v48
    %104 = vmatpush.msra.mxu0 %v47
    %105 = vmatpush.msra.mxu0 %v46
    %106 = vmatpush.msra.mxu0 %v45
    %107 = vmatpush.msra.mxu0 %v44
    %108 = vmatpush.msra.mxu0 %v43
    %109 = vmatpush.msra.mxu0 %v42
    %110 = vmatpush.msra.mxu0 %v41
    %111 = vmatpush.msra.mxu0 %v40
    %112 = vmatpush.msra.mxu0 %v39
    %113 = vmatpush.msra.mxu0 %v38
    %114 = vmatpush.msra.mxu0 %v37
    %115 = vmatpush.msra.mxu0 %v36
    %116 = vmatpush.msra.mxu0 %v35
    %117 = vmatpush.msra.mxu0 %v34
    %118 = vmatmul.f32.gmra.mxu0 %v30
    %v119 = vpop.f32.mrf.mxu0
    %v120 = vadd.f32 %v100, %v119
    %121 = vdwg.mxu0
    %122 = vmatpush.msra.mxu0 %v65
    %123 = vmatpush.msra.mxu0 %v64
    %124 = vmatpush.msra.mxu0 %v63
    %125 = vmatpush.msra.mxu0 %v62
    %126 = vmatpush.msra.mxu0 %v61
    %127 = vmatpush.msra.mxu0 %v60
    %128 = vmatpush.msra.mxu0 %v59
    %129 = vmatpush.msra.mxu0 %v58
    %130 = vmatpush.msra.mxu0 %v57
    %131 = vmatpush.msra.mxu0 %v56
    %132 = vmatpush.msra.mxu0 %v55
    %133 = vmatpush.msra.mxu0 %v54
    %134 = vmatpush.msra.mxu0 %v53
    %135 = vmatpush.msra.mxu0 %v52
    %136 = vmatpush.msra.mxu0 %v51
    %137 = vmatpush.msra.mxu0 %v50
    %138 = vmatmul.f32.gmra.mxu0 %v31
    %v139 = vpop.f32.mrf.mxu0
    %v140 = vadd.f32 %v120, %v139
    %141 = vdwg.mxu0
    %142 = vmatpush.msra.mxu0 %v81
    %143 = vmatpush.msra.mxu0 %v80
    %144 = vmatpush.msra.mxu0 %v79
    %145 = vmatpush.msra.mxu0 %v78
    %146 = vmatpush.msra.mxu0 %v77
    %147 = vmatpush.msra.mxu0 %v76
    %148 = vmatpush.msra.mxu0 %v75
    %149 = vmatpush.msra.mxu0 %v74
    %150 = vmatpush.msra.mxu0 %v73
    %151 = vmatpush.msra.mxu0 %v72
    %152 = vmatpush.msra.mxu0 %v71
    %153 = vmatpush.msra.mxu0 %v70
    %154 = vmatpush.msra.mxu0 %v69
    %155 = vmatpush.msra.mxu0 %v68
    %156 = vmatpush.msra.mxu0 %v67
    %157 = vmatpush.msra.mxu0 %v66
    %158 = vmatmul.f32.gmra.mxu0 %v32
    %v159 = vpop.f32.mrf.mxu0
    %v160 = vadd.f32 %v140, %v159
    %161 = vdwg.mxu0
    %162 = vmatpush.msra.mxu0 %v97
    %163 = vmatpush.msra.mxu0 %v96
    %164 = vmatpush.msra.mxu0 %v95
    %165 = vmatpush.msra.mxu0 %v94
    %166 = vmatpush.msra.mxu0 %v93
    %167 = vmatpush.msra.mxu0 %v92
    %168 = vmatpush.msra.mxu0 %v91
    %169 = vmatpush.msra.mxu0 %v90
    %170 = vmatpush.msra.mxu0 %v89
    %171 = vmatpush.msra.mxu0 %v88
    %172 = vmatpush.msra.mxu0 %v87
    %173 = vmatpush.msra.mxu0 %v86
    %174 = vmatpush.msra.mxu0 %v85
    %175 = vmatpush.msra.mxu0 %v84
    %176 = vmatpush.msra.mxu0 %v83
    %177 = vmatpush.msra.mxu0 %v82
    %178 = vmatmul.f32.gmra.mxu0 %v33
    %v179 = vpop.f32.mrf.mxu0
    %v180 = vadd.f32 %v160, %v179
    %181 = vdwg.mxu0
    %v182 = vld [vmem:[%s3] sm:$0xff]
    %v183 = vld [vmem:[%s3 + $0x8] sm:$0xff]
    %v184 = vld [vmem:[%s3 + $0x10] sm:$0xff]
    %v185 = vld [vmem:[%s3 + $0x18] sm:$0xff]
    %v186 = vld [vmem:[%s3 + $0x20] sm:$0xff]
    %v187 = vld [vmem:[%s3 + $0x28] sm:$0xff]
    %v188 = vld [vmem:[%s3 + $0x30] sm:$0xff]
    %v189 = vld [vmem:[%s3 + $0x38] sm:$0xff]
    %v190 = vld [vmem:[%s3 + $0x40] sm:$0xff]
    %v191 = vld [vmem:[%s3 + $0x48] sm:$0xff]
    %v192 = vld [vmem:[%s3 + $0x50] sm:$0xff]
    %v193 = vld [vmem:[%s3 + $0x58] sm:$0xff]
    %v194 = vld [vmem:[%s3 + $0x60] sm:$0xff]
    %v195 = vld [vmem:[%s3 + $0x68] sm:$0xff]
    %v196 = vld [vmem:[%s3 + $0x70] sm:$0xff]
    %v197 = vld [vmem:[%s3 + $0x78] sm:$0xff]
    %v198 = vld [vmem:[%s4] sm:$0x1]
    %v200 = vperm.slane %v198, 0
    %202 = vmatpush.msra.mxu0 %v197
    %203 = vmatpush.msra.mxu0 %v196
    %204 = vmatpush.msra.mxu0 %v195
    %205 = vmatpush.msra.mxu0 %v194
    %206 = vmatpush.msra.mxu0 %v193
    %207 = vmatpush.msra.mxu0 %v192
    %208 = vmatpush.msra.mxu0 %v191
    %209 = vmatpush.msra.mxu0 %v190
    %210 = vmatpush.msra.mxu0 %v189
    %211 = vmatpush.msra.mxu0 %v188
    %212 = vmatpush.msra.mxu0 %v187
    %213 = vmatpush.msra.mxu0 %v186
    %214 = vmatpush.msra.mxu0 %v185
    %215 = vmatpush.msra.mxu0 %v184
    %216 = vmatpush.msra.mxu0 %v183
    %217 = vmatpush.msra.mxu0 %v182
    %218 = vmatmul.f32.gmra.mxu0 %v180
    %v219 = vpop.f32.mrf.mxu0
    %v220 = vadd.f32 %v200, %v219
    %221 = vdwg.mxu0
    %v222 = vld [vmem:[%s5] sm:$0xff]
    %v223 = vld [vmem:[%s5 + $0x8] sm:$0xff]
    %v224 = vld [vmem:[%s5 + $0x10] sm:$0xff]
    %v225 = vld [vmem:[%s5 + $0x18] sm:$0xff]
    %v226 = vld [vmem:[%s5 + $0x20] sm:$0xff]
    %v227 = vld [vmem:[%s5 + $0x28] sm:$0xff]
    %v228 = vld [vmem:[%s5 + $0x30] sm:$0xff]
    %v229 = vld [vmem:[%s5 + $0x38] sm:$0xff]
    %v230 = vld [vmem:[%s5 + $0x40] sm:$0xff]
    %v231 = vld [vmem:[%s5 + $0x48] sm:$0xff]
    %v232 = vld [vmem:[%s5 + $0x50] sm:$0xff]
    %v233 = vld [vmem:[%s5 + $0x58] sm:$0xff]
    %v234 = vld [vmem:[%s5 + $0x60] sm:$0xff]
    %v235 = vld [vmem:[%s5 + $0x68] sm:$0xff]
    %v236 = vld [vmem:[%s5 + $0x70] sm:$0xff]
    %v237 = vld [vmem:[%s5 + $0x78] sm:$0xff]
    %v238 = vld [vmem:[%s6] sm:$0x1]
    %v240 = vperm.slane %v238, 0
    %242 = vmatpush.msra.mxu0 %v237
    %243 = vmatpush.msra.mxu0 %v236
    %244 = vmatpush.msra.mxu0 %v235
    %245 = vmatpush.msra.mxu0 %v234
    %246 = vmatpush.msra.mxu0 %v233
    %247 = vmatpush.msra.mxu0 %v232
    %248 = vmatpush.msra.mxu0 %v231
    %249 = vmatpush.msra.mxu0 %v230
    %250 = vmatpush.msra.mxu0 %v229
    %251 = vmatpush.msra.mxu0 %v228
    %252 = vmatpush.msra.mxu0 %v227
    %253 = vmatpush.msra.mxu0 %v226
    %254 = vmatpush.msra.mxu0 %v225
    %255 = vmatpush.msra.mxu0 %v224
    %256 = vmatpush.msra.mxu0 %v223
    %257 = vmatpush.msra.mxu0 %v222
    %258 = vmatmul.f32.gmra.mxu0 %v220
    %v259 = vpop.f32.mrf.mxu0
    %v260 = vadd.f32 %v240, %v259
    %261 = vdwg.mxu0
    %v262 = vlaneseq
    %v263 = vand.u32 %v262, 127
    %vm264 = vcmp.lt.s32.totalorder %v263, 10
    %v265 = vsel %vm264, %v260, -1e+30
    %266 = vmax.xlane.f32.xlu0 %v265
    %v267 = vpop.xlane.xlu0 %266
    %v268 = vsub.f32 %v265, %v267
    %v269 = vmul.f32 %v268, 1.442695
    %v270 = vpow.pop %v269
    %271 = vadd.xlane.f32.xlu0 %v270
    %v272 = vpop.xlane.xlu0 %271
    %v273 = vlog2.pop %v272
    %v274 = vmul.f32 %v273, 0.6931472
    %v275 = vsub.f32 %v268, %v274
    %v276 = vld [vmem:[%s7] sm:$0xff]
    %v277 = vmul.f32 %v276, %v275
    %278 = vadd.xlane.f32.xlu0 %v277
    %v279 = vpop.xlane.xlu0 %278
    %v280 = vrot.slane %v279, 4
    %v281 = vadd.f32 %v279, %v280
    %v282 = vrot.slane %v281, 2
    %v283 = vadd.f32 %v281, %v282
    %v284 = vrot.slane %v283, 1
    %v285 = vadd.f32 %v283, %v284
    %s286 = vtos %v285
    %s287 = ssub.f32 0.0, %s286
    %s288 = smul.f32 %s287, 0.5
    %s289 = scalar_lea.smem [#allocation2], 0
    %290 = sst [smem:[%s289]] %s288
    // Predicated region
    $region34: #{lenet_loss_pallas.5} parent=1 // pred_check
      _
    $region35: #{lenet_loss_pallas.5} parent=1 // pred_check_branch
      %292 = sbr.rel (0) target = $region37
    $region36: #{lenet_loss_pallas.5} parent=1 // pred_region
      %294 = vsyncadd [#allocation3], 0
      %s296 = sshll.u32 %s8, 4
      %s297 = int_to_ptr.hbm [resolvable:$true] %s296
      %299 = dma.smem_to_hbm [#allocation2], 16, %s297, [#allocation3]
    $region37: #{lenet_loss_pallas.5} parent=1 // pred_fallthru
      _
    // Predicated region
    $region38: #{lenet_loss_pallas.5} parent=1 // pred_check
      _
    $region39: #{lenet_loss_pallas.5} parent=1 // pred_check_branch
      %301 = sbr.rel (0) target = $region41
    $region40: #{lenet_loss_pallas.5} parent=1 // pred_region
      %303 = dma.done [#allocation3], 16
    $region41: #{lenet_loss_pallas.5} parent=1 // pred_fallthru
      _
    %304 = sfence
    %305 = vsyncpa [#allocation3], 1

</llo_original>
